<compile_context>
chip_gen: v5e
topology: v5e:2x2
jax: 0.10.0
libtpu: 0.0.40
codegen_flags: <defaults>
</compile_context>

<pallas_src>
import jax
import jax.numpy as jnp
from jax.experimental import pallas as pl
from jax.experimental.pallas import tpu as pltpu

LANE = 128
# Conservative scoped-VMEM limit that leaves double-buffering headroom on every
# generation (v7x only has 64 MiB physical VMEM).
VMEM_LIMIT = 32 * 1024 * 1024


# ---------------------------------------------------------------------------
# helpers
# ---------------------------------------------------------------------------
def _ceil_to(x, m):
    return ((x + m - 1) // m) * m


def _pick_divisor_tile(total, target, quantum=8):
    """Largest multiple of `quantum` <= target that divides `total` (else `total`)."""
    t = min(target, total)
    t -= t % quantum
    while t >= quantum:
        if total % t == 0:
            return t
        t -= quantum
    return total


def _pad_to(a, axis, size):
    pad = [(0, 0)] * a.ndim
    pad[axis] = (0, size - a.shape[axis])
    return jnp.pad(a, pad)


# ---------------------------------------------------------------------------
# Pallas kernels
# ---------------------------------------------------------------------------
def _conv1x1_dual_kernel(x_ref, w_ref, b_ref, o1_ref, o2_ref):
    # Fused conv1 + conv2: one matmul over the concatenated weights, split outputs.
    y = jnp.dot(x_ref[...], w_ref[...], preferred_element_type=jnp.float32)
    y = y + b_ref[...]
    y = y * jax.nn.sigmoid(y)                               # SiLU
    hp = o1_ref.shape[-1]
    o1_ref[...] = y[:, :hp].astype(o1_ref.dtype)
    o2_ref[...] = y[:, hp:].astype(o2_ref.dtype)


def _conv1x1_kernel(x_ref, w_ref, b_ref, o_ref):
    y = jnp.dot(x_ref[...], w_ref[...], preferred_element_type=jnp.float32)
    y = y + b_ref[...]
    y = y * jax.nn.sigmoid(y)                               # SiLU
    o_ref[...] = y.astype(o_ref.dtype)


def _conv1x1_2in_kernel(a_ref, b2_ref, wa_ref, wb_ref, bias_ref, o_ref):
    # conv3 without the HBM concatenate: cat(x1, x2) @ W == x1 @ W_top + x2 @ W_bot.
    y = jnp.dot(a_ref[...], wa_ref[...], preferred_element_type=jnp.float32)
    y = y + jnp.dot(b2_ref[...], wb_ref[...], preferred_element_type=jnp.float32)
    y = y + bias_ref[...]
    y = y * jax.nn.sigmoid(y)                               # SiLU
    o_ref[...] = y.astype(o_ref.dtype)


def _conv3x3_bn_silu_add_kernel(h1p_hbm, w_ref, b_ref, res_ref, o_ref, halo_ref, sem):
    # h1p_hbm : (N, H+2, W+2, C) spatially zero-padded input, left in HBM (pl.ANY)
    # w_ref   : (9*C, C) folded 3x3 weights (tap-major, matches tap concat order)
    # b_ref   : (1, C)
    # res_ref : (1, TH, W, C) residual tile      o_ref: (1, TH, W, C)
    # halo_ref: VMEM scratch (TH+2, W+2, C)      sem  : DMA semaphore
    n = pl.program_id(0)
    i = pl.program_id(1)
    _, th, w, c = o_ref.shape
    row0 = pl.multiple_of(i * th, th)
    dma = pltpu.make_async_copy(h1p_hbm.at[n, pl.ds(row0, th + 2)], halo_ref, sem)
    dma.start()
    dma.wait()
    # Build the 9 im2col taps from the VMEM halo strip and fold K = 9*C into a
    # single MXU matmul.
    taps = [halo_ref[dy:dy + th, dx:dx + w, :].reshape(th * w, c)
            for dy in range(3) for dx in range(3)]
    tap_mat = jnp.concatenate(taps, axis=-1)                # (TH*W, 9*C)
    y = jnp.dot(tap_mat, w_ref[...], preferred_element_type=jnp.float32)
    y = y + b_ref[...]
    y = y * jax.nn.sigmoid(y)                               # SiLU
    y = y + res_ref[...].reshape(th * w, c).astype(jnp.float32)   # shortcut add
    o_ref[...] = y.reshape(o_ref.shape).astype(o_ref.dtype)


# ---------------------------------------------------------------------------
# pallas_call wrappers
# ---------------------------------------------------------------------------
def conv1x1_dual_bn_silu(x2d, w, b, tm):
    M, cin = x2d.shape
    cw = w.shape[1]
    hp = cw // 2
    cost = pl.CostEstimate(
        flops=int(2 * M * cin * cw),
        transcendentals=int(M * cw),
        bytes_accessed=int(4 * (M * cin + cin * cw + cw + 2 * M * hp)))
    return pl.pallas_call(
        _conv1x1_dual_kernel,
        out_shape=(jax.ShapeDtypeStruct((M, hp), x2d.dtype),
                   jax.ShapeDtypeStruct((M, hp), x2d.dtype)),
        grid=(M // tm,),
        in_specs=[
            pl.BlockSpec((tm, cin), lambda i: (i, 0)),
            pl.BlockSpec((cin, cw), lambda i: (0, 0)),
            pl.BlockSpec((1, cw), lambda i: (0, 0)),
        ],
        out_specs=(pl.BlockSpec((tm, hp), lambda i: (i, 0)),
                   pl.BlockSpec((tm, hp), lambda i: (i, 0))),
        compiler_params=pltpu.CompilerParams(
            dimension_semantics=("parallel",), vmem_limit_bytes=VMEM_LIMIT),
        cost_estimate=cost,
    )(x2d, w, b)


def conv1x1_bn_silu(x2d, w, b, tm):
    M, cin = x2d.shape
    cout = w.shape[1]
    cost = pl.CostEstimate(
        flops=int(2 * M * cin * cout),
        transcendentals=int(M * cout),
        bytes_accessed=int(4 * (M * cin + cin * cout + cout + M * cout)))
    return pl.pallas_call(
        _conv1x1_kernel,
        out_shape=jax.ShapeDtypeStruct((M, cout), x2d.dtype),
        grid=(M // tm,),
        in_specs=[
            pl.BlockSpec((tm, cin), lambda i: (i, 0)),
            pl.BlockSpec((cin, cout), lambda i: (0, 0)),
            pl.BlockSpec((1, cout), lambda i: (0, 0)),
        ],
        out_specs=pl.BlockSpec((tm, cout), lambda i: (i, 0)),
        compiler_params=pltpu.CompilerParams(
            dimension_semantics=("parallel",), vmem_limit_bytes=VMEM_LIMIT),
        cost_estimate=cost,
    )(x2d, w, b)


def conv1x1_2in_bn_silu(a2d, b2d, wa, wb, bias, tm):
    M, ca = a2d.shape
    cb = b2d.shape[1]
    cout = wa.shape[1]
    cost = pl.CostEstimate(
        flops=int(2 * M * (ca + cb) * cout),
        transcendentals=int(M * cout),
        bytes_accessed=int(4 * (M * ca + M * cb + (ca + cb) * cout + cout + M * cout)))
    return pl.pallas_call(
        _conv1x1_2in_kernel,
        out_shape=jax.ShapeDtypeStruct((M, cout), a2d.dtype),
        grid=(M // tm,),
        in_specs=[
            pl.BlockSpec((tm, ca), lambda i: (i, 0)),
            pl.BlockSpec((tm, cb), lambda i: (i, 0)),
            pl.BlockSpec((ca, cout), lambda i: (0, 0)),
            pl.BlockSpec((cb, cout), lambda i: (0, 0)),
            pl.BlockSpec((1, cout), lambda i: (0, 0)),
        ],
        out_specs=pl.BlockSpec((tm, cout), lambda i: (i, 0)),
        compiler_params=pltpu.CompilerParams(
            dimension_semantics=("parallel",), vmem_limit_bytes=VMEM_LIMIT),
        cost_estimate=cost,
    )(a2d, b2d, wa, wb, bias)


def conv3x3_bn_silu_add(h1_padded, w9, b, res_nhwc, th):
    N, H, W, C = res_nhwc.shape
    kc = w9.shape[0]                                        # 9*C
    cost = pl.CostEstimate(
        flops=int(2 * N * H * W * kc * C),
        transcendentals=int(N * H * W * C),
        bytes_accessed=int(4 * (h1_padded.size + w9.size + b.size + 2 * res_nhwc.size)))
    return pl.pallas_call(
        _conv3x3_bn_silu_add_kernel,
        out_shape=jax.ShapeDtypeStruct((N, H, W, C), res_nhwc.dtype),
        grid=(N, H // th),
        in_specs=[
            pl.BlockSpec(memory_space=pl.ANY),              # halo fetched by manual DMA
            pl.BlockSpec((kc, C), lambda n, i: (0, 0)),
            pl.BlockSpec((1, C), lambda n, i: (0, 0)),
            pl.BlockSpec((1, th, W, C), lambda n, i: (n, i, 0, 0)),
        ],
        out_specs=pl.BlockSpec((1, th, W, C), lambda n, i: (n, i, 0, 0)),
        scratch_shapes=[pltpu.VMEM((th + 2, W + 2, C), h1_padded.dtype),
                        pltpu.SemaphoreType.DMA],
        compiler_params=pltpu.CompilerParams(
            dimension_semantics=("parallel", "parallel"),
            vmem_limit_bytes=VMEM_LIMIT),
        cost_estimate=cost,
    )(h1_padded, w9, b, res_nhwc)


# ---------------------------------------------------------------------------
# Parameter construction (deterministic, BN folded, channels zero-padded to 128)
# ---------------------------------------------------------------------------
def _fold_bn(w, gamma, beta, mean, var, eps=1e-5):
    scale = gamma / jnp.sqrt(var + eps)                     # (Cout,)
    return w * scale, beta - mean * scale


def init_baseconv(key, cin, cout, ksize, cin_pad, cout_pad):
    kw, kg, kb, km, kv = jax.random.split(key, 5)
    fan_in = cin * ksize * ksize
    shape = (cin, cout) if ksize == 1 else (ksize, ksize, cin, cout)
    w = jax.random.normal(kw, shape, jnp.float32) / jnp.sqrt(fan_in)
    gamma = 1.0 + 0.1 * jax.random.normal(kg, (cout,), jnp.float32)
    beta = 0.1 * jax.random.normal(kb, (cout,), jnp.float32)
    mean = 0.1 * jax.random.normal(km, (cout,), jnp.float32)
    var = 1.0 + 0.1 * jnp.abs(jax.random.normal(kv, (cout,), jnp.float32))
    wf, bf = _fold_bn(w, gamma, beta, mean, var)
    # Zero-pad channels for lane-dense stores; padded lanes stay exactly 0.
    wf = _pad_to(wf, -1, cout_pad)
    wf = _pad_to(wf, -2, cin_pad)
    bf = _pad_to(bf, 0, cout_pad)
    if ksize == 3:
        wf = wf.reshape(ksize * ksize * cin_pad, cout_pad)  # tap-major folded K
    return wf, bf.reshape(1, cout_pad)


def init_csp_layer(key, in_channels, out_channels, depth=1, expansion=0.5):
    hidden = int(out_channels * expansion)
    hidden_p = _ceil_to(hidden, LANE)
    out_p = _ceil_to(out_channels, LANE)
    keys = jax.random.split(key, 3 + 2 * depth)
    w1, b1 = init_baseconv(keys[0], in_channels, hidden, 1, in_channels, hidden_p)
    w2, b2 = init_baseconv(keys[1], in_channels, hidden, 1, in_channels, hidden_p)
    w3, b3 = init_baseconv(keys[2], 2 * hidden, out_channels, 1, 2 * hidden, out_p)
    params = {
        "w12": jnp.concatenate([w1, w2], axis=1),           # (Cin, 2*hidden_p)
        "b12": jnp.concatenate([b1, b2], axis=1),           # (1, 2*hidden_p)
        "w3a": _pad_to(w3[:hidden, :], 0, hidden_p),        # rows acting on x_1
        "w3b": _pad_to(w3[hidden:, :], 0, hidden_p),        # rows acting on x_2
        "b3": b3,
        "m": [],
        "hidden": hidden, "hidden_p": hidden_p,
        "out_channels": out_channels, "out_p": out_p,
    }
    for d in range(depth):
        # Bottleneck(hidden, hidden, shortcut=True, expansion=1.0)
        bc1 = init_baseconv(keys[3 + 2 * d], hidden, hidden, 1, hidden_p, hidden_p)
        bc2 = init_baseconv(keys[4 + 2 * d], hidden, hidden, 3, hidden_p, hidden_p)
        params["m"].append((bc1, bc2))
    return params


# ---------------------------------------------------------------------------
# CSPLayer forward (NCHW in / NCHW out, matching the PyTorch reference)
# ---------------------------------------------------------------------------
def csp_layer_forward(x_nchw, params, *, tm_target=256, th_target=8):
    # TODO(synk): a production integration should accept/produce NHWC directly and
    #             drop these boundary transposes (each is an extra HBM round trip).
    x = jnp.transpose(x_nchw, (0, 2, 3, 1))                 # -> NHWC
    N, H, W, cin = x.shape
    hp = params["hidden_p"]
    M = N * H * W
    tm = _pick_divisor_tile(M, tm_target, 8)                # use 512-1024 for prod M
    th = _pick_divisor_tile(H, th_target, 1)

    x2d = x.reshape(M, cin)
    x1, x2 = conv1x1_dual_bn_silu(x2d, params["w12"], params["b12"], tm)

    cur = x1                                                # (M, hidden_p)
    for (w_bc1, b_bc1), (w_bc2, b_bc2) in params["m"]:
        h1 = conv1x1_bn_silu(cur, w_bc1, b_bc1, tm)                     # 1x1
        h1p = jnp.pad(h1.reshape(N, H, W, hp),
                      ((0, 0), (1, 1), (1, 1), (0, 0)))                 # spatial pad
        y = conv3x3_bn_silu_add(h1p, w_bc2, b_bc2,
                                cur.reshape(N, H, W, hp), th)           # 3x3 + add
        cur = y.reshape(M, hp)

    out2d = conv1x1_2in_bn_silu(cur, x2, params["w3a"], params["w3b"],
                                params["b3"], tm)                       # conv3
    out = out2d.reshape(N, H, W, -1)[..., :params["out_channels"]]
    return jnp.transpose(out, (0, 3, 1, 2))                 # back to NCHW


# ---------------------------------------------------------------------------
# Pure-JAX reference (for in-script validation)
# ---------------------------------------------------------------------------
def csp_layer_reference(x_nchw, params):
    hi = jax.lax.Precision.HIGHEST
    x = jnp.transpose(x_nchw, (0, 2, 3, 1))
    hp = params["hidden_p"]

    def silu(v):
        return v * jax.nn.sigmoid(v)

    def c1x1(t, w, b):
        return silu(jnp.einsum("nhwc,cd->nhwd", t, w, precision=hi)
                    + b.reshape(1, 1, 1, -1))

    y12 = c1x1(x, params["w12"], params["b12"])
    x1, x2 = y12[..., :hp], y12[..., hp:]
    cur = x1
    for (w_a, b_a), (w_b, b_b) in params["m"]:
        h1 = c1x1(cur, w_a, b_a)
        conv = jax.lax.conv_general_dilated(
            h1, w_b.reshape(3, 3, hp, hp), window_strides=(1, 1),
            padding=((1, 1), (1, 1)),
            dimension_numbers=("NHWC", "HWIO", "NHWC"), precision=hi)
        cur = silu(conv + b_b.reshape(1, 1, 1, -1)) + cur
    out = silu(jnp.einsum("nhwc,cd->nhwd", cur, params["w3a"], precision=hi)
               + jnp.einsum("nhwc,cd->nhwd", x2, params["w3b"], precision=hi)
               + params["b3"].reshape(1, 1, 1, -1))
    out = out[..., :params["out_channels"]]
    return jnp.transpose(out, (0, 3, 1, 2))


# ---------------------------------------------------------------------------
if __name__ == "__main__":
    key = jax.random.PRNGKey(0)
    k_param, k_x = jax.random.split(key)

    in_channels, out_channels = 4, 8                        # hidden = 4 (padded to 128)
    params = init_csp_layer(k_param, in_channels, out_channels, depth=1, expansion=0.5)

    x = jax.random.normal(k_x, (2, in_channels, 16, 16), jnp.float32)   # NCHW

    out = csp_layer_forward(x, params)
    jax.block_until_ready(out)
    assert out.shape == (2, out_channels, 16, 16)

    ref = csp_layer_reference(x, params)
    assert bool(jnp.allclose(out, ref, rtol=2e-2, atol=2e-2)), \
        float(jnp.max(jnp.abs(out - ref)))

    print("KERNEL_OK")
</pallas_src>

<mosaic_0001>
module attributes {stable_mosaic.version = 11 : i64} {
  func.func @_conv1x1_dual_kernel(%arg0: i32, %arg1: memref<256x4xf32, #tpu.memory_space<vmem>>, %arg2: memref<4x256xf32, #tpu.memory_space<vmem>>, %arg3: memref<1x256xf32, #tpu.memory_space<vmem>>, %arg4: memref<256x128xf32, #tpu.memory_space<vmem>>, %arg5: memref<256x128xf32, #tpu.memory_space<vmem>>) attributes {dimension_semantics = [#tpu.dimension_semantics<parallel>], iteration_bounds = array<i64: 2>, scalar_prefetch = 0 : i64, scratch_operands = 0 : i64, tpu.core_type = #tpu.core_type<tc>, window_params = [{transform_indices = @transform_0, window_bounds = array<i64: 256, 4>}, {pipeline_mode = #tpu.pipeline_mode<synchronous>, transform_indices = @transform_1, window_bounds = array<i64: 4, 256>}, {pipeline_mode = #tpu.pipeline_mode<synchronous>, transform_indices = @transform_2, window_bounds = array<i64: 1, 256>}, {transform_indices = @transform_3, window_bounds = array<i64: 256, 128>}, {transform_indices = @transform_4, window_bounds = array<i64: 256, 128>}]} {
    %c0 = arith.constant 0 : index
    %c0_0 = arith.constant 0 : index
    %0 = vector.load %arg1[%c0, %c0_0] : memref<256x4xf32, #tpu.memory_space<vmem>>, vector<256x4xf32>
    %c0_1 = arith.constant 0 : index
    %c0_2 = arith.constant 0 : index
    %1 = vector.load %arg2[%c0_1, %c0_2] : memref<4x256xf32, #tpu.memory_space<vmem>>, vector<4x256xf32>
    %cst = arith.constant dense<0.000000e+00> : vector<256x256xf32>
    %2 = tpu.matmul %0, %1, %cst {dimension_numbers = #tpu.dot_dimension_numbers<[1], [0], [0], [1], [0, 0, 1, 1], [], []>} : vector<256x4xf32>, vector<4x256xf32>, vector<256x256xf32> -> vector<256x256xf32>
    %c0_3 = arith.constant 0 : index
    %c0_4 = arith.constant 0 : index
    %3 = vector.load %arg3[%c0_3, %c0_4] : memref<1x256xf32, #tpu.memory_space<vmem>>, vector<1x256xf32>
    %4 = vector.broadcast %3 : vector<1x256xf32> to vector<256x256xf32>
    %5 = arith.addf %2, %4 : vector<256x256xf32>
    %6 = arith.negf %5 : vector<256x256xf32>
    %7 = math.exp %6 : vector<256x256xf32>
    %cst_5 = arith.constant 1.000000e+00 : f32
    %8 = vector.broadcast %cst_5 : f32 to vector<256x256xf32>
    %9 = arith.addf %8, %7 : vector<256x256xf32>
    %10 = arith.divf %8, %9 : vector<256x256xf32>
    %11 = arith.mulf %5, %10 : vector<256x256xf32>
    %12 = vector.extract_strided_slice %11 {offsets = [0, 0], sizes = [256, 128], strides = [1, 1]} : vector<256x256xf32> to vector<256x128xf32>
    %c0_6 = arith.constant 0 : index
    %c0_7 = arith.constant 0 : index
    %13 = vector.load %arg4[%c0_6, %c0_7] : memref<256x128xf32, #tpu.memory_space<vmem>>, vector<256x128xf32>
    tpu.vector_store %arg4[%c0_6, %c0_7], %12 {strides = array<i32>} : memref<256x128xf32, #tpu.memory_space<vmem>>, vector<256x128xf32>,
    %14 = vector.extract_strided_slice %11 {offsets = [0, 128], sizes = [256, 128], strides = [1, 1]} : vector<256x256xf32> to vector<256x128xf32>
    %c0_8 = arith.constant 0 : index
    %c0_9 = arith.constant 0 : index
    %15 = vector.load %arg5[%c0_8, %c0_9] : memref<256x128xf32, #tpu.memory_space<vmem>>, vector<256x128xf32>
    tpu.vector_store %arg5[%c0_8, %c0_9], %14 {strides = array<i32>} : memref<256x128xf32, #tpu.memory_space<vmem>>, vector<256x128xf32>,
    return
  }
  func.func @transform_0(%arg0: i32) -> (i32, i32) {
    %c0_i32 = arith.constant 0 : i32
    %c0_i32_0 = arith.constant 0 : i32
    return %arg0, %c0_i32 : i32, i32
  }
  func.func @transform_1(%arg0: i32) -> (i32, i32) {
    %c0_i32 = arith.constant 0 : i32
    %c0_i32_0 = arith.constant 0 : i32
    %c0_i32_1 = arith.constant 0 : i32
    return %c0_i32, %c0_i32_0 : i32, i32
  }
  func.func @transform_2(%arg0: i32) -> (i32, i32) {
    %c0_i32 = arith.constant 0 : i32
    %c0_i32_0 = arith.constant 0 : i32
    %c0_i32_1 = arith.constant 0 : i32
    return %c0_i32, %c0_i32_0 : i32, i32
  }
  func.func @transform_3(%arg0: i32) -> (i32, i32) {
    %c0_i32 = arith.constant 0 : i32
    %c0_i32_0 = arith.constant 0 : i32
    return %arg0, %c0_i32 : i32, i32
  }
  func.func @transform_4(%arg0: i32) -> (i32, i32) {
    %c0_i32 = arith.constant 0 : i32
    %c0_i32_0 = arith.constant 0 : i32
    return %arg0, %c0_i32 : i32, i32
  }
}

</mosaic_0001>

<llo_original>
// kernel: tpu_custom_call.1
$region0: #{tpu_custom_call.1}
  #allocation0 [shape = 'u32[]', space=smem, size = 0x4, offset = 0x4, fixed_abs, tag = 'smem constant byte address 0x4 - core index']
  #allocation1 [shape = 'u32[72,128]{1,0:T(1,128)}', space=vmem, size = 0x9000, scoped, tag = 'internal scratch']
  %s0 = inlined_call_operand.vmem [shape: f32[512,4], index: 0, kind: input, shape index: {}]
  %s1 = inlined_call_operand.vmem [shape: f32[4,256], index: 1, kind: input, shape index: {}]
  %s2 = inlined_call_operand.vmem [shape: f32[1,256], index: 2, kind: input, shape index: {}]
  %s3 = inlined_call_operand.hbm [shape: f32[512,128], index: 3, kind: output, shape index: {0}]
  %s4 = inlined_call_operand.hbm [shape: f32[512,128], index: 4, kind: output, shape index: {1}]
  %5 = xla_tuple %s3, %s4
  %s6 = sld [smem:[#allocation0]]
  $region53: #{tpu_custom_call.1} parent=0
    _
  %s8 = ssub.s32 1, %s6
  %s9 = scalar_select 0, %s8, %s6
  $region1: #{tpu_custom_call.1} parent=0
    #allocation2 [shape = 'u8[262144]{0}', space=vmem, size = 0x40000, scoped, tag = 'output window, operand 0']
    #allocation3 [shape = 's32[2]{0}', space=sflag, size = 0x8, scoped, tag = 'scoped memory for tpu_custom_call.1']
    #allocation4 [shape = 'u8[262144]{0}', space=vmem, size = 0x40000, scoped, tag = 'output window, operand 1']
    #allocation5 [shape = 's32[2]{0}', space=sflag, size = 0x8, scoped, tag = 'scoped memory for tpu_custom_call.1']
    %10 = vsyncpa [#allocation3], 0
    %s11 = scalar_lea.sflag [#allocation3], 1
    %12 = vsyncpa %s11, 0
    %13 = vsyncpa [#allocation5], 0
    %s14 = scalar_lea.sflag [#allocation5], 1
    %15 = vsyncpa %s14, 0
    loop: start=0, step=1, limit=4
    $region2: #{tpu_custom_call.1} parent=1 // loop_pre_header
      _
    $region3: #{tpu_custom_call.1} parent=1 // loop_header
      %s17 = sphi 0, %s21
      %p18 = scmp.ge.s32.totalorder %s17, 4
      %s27 = sphi 0, %s29
      %s30 = sphi 0, %s27
      %s31 = sphi 0, %s30
      %s47 = sphi 0, %s31
      %s51 = sphi 0, %s51
      %s53 = sphi 0, %s51
      %s54 = sphi 0, %s53
      %s68 = sphi 0, %s54
      %s72 = sphi 0, %s72
      %s74 = sphi 0, %s72
      %s75 = sphi 0, %s74
      %s89 = sphi 0, %s75
      %s95 = sphi 0, %s97
      %s98 = sphi 0, %s95
      %s99 = sphi 0, %s98
      %s115 = sphi 0, %s99
      %s121 = sphi 0, %s123
      %s124 = sphi 0, %s121
      %s125 = sphi 0, %s124
      %s141 = sphi 0, %s125
    $region4: #{tpu_custom_call.1} parent=1 // loop_header_branch
      %20 = sbr.rel (%p18) target = $region8
    $region5: #{tpu_custom_call.1} parent=1 // loop_body
      %s22 = ssub.s32 %s17, 1
      %s23 = ssub.s32 %s17, 2
      %s24 = sadd.s32 %s17, 1
      %s25 = ssub.s32 %s17, %s24
      %p26 = scmp.eq.s32.totalorder %s25, 0
      %s28 = sadd.s32 %s27, 1
      %s29 = scalar_select %p26, %s27, %s28
      %p32 = pneg %p26
      %p33 = scmp.eq.s32.totalorder %s17, 1
      %p34 = por %p32, %p33
      %p35 = scmp.ne.s32.totalorder %s27, %s30
      %p36 = scmp.eq.s32.totalorder %s17, 0
      %p37 = por %p35, %p36
      %p38 = scmp.ne.s32.totalorder %s27, %s30
      %p39 = scmp.eq.s32.totalorder %s22, 1
      %p40 = por %p38, %p39
      %p41 = scmp.ne.s32.totalorder %s30, %s31
      %p42 = scmp.eq.s32.totalorder %s22, 0
      %p43 = por %p41, %p42
      %p44 = scmp.ne.s32.totalorder %s30, %s31
      %p45 = scmp.eq.s32.totalorder %s23, 1
      %p46 = por %p44, %p45
      %p48 = scmp.ne.s32.totalorder %s31, %s47
      %p49 = scmp.eq.s32.totalorder %s23, 0
      %p50 = por %p48, %p49
      %s52 = sadd.s32 %s51, 1
      %p55 = scmp.eq.s32.totalorder %s17, 1
      %p56 = scmp.ne.s32.totalorder %s51, %s53
      %p57 = scmp.eq.s32.totalorder %s17, 0
      %p58 = por %p56, %p57
      %p59 = scmp.ne.s32.totalorder %s51, %s53
      %p60 = scmp.eq.s32.totalorder %s22, 1
      %p61 = por %p59, %p60
      %p62 = scmp.ne.s32.totalorder %s53, %s54
      %p63 = scmp.eq.s32.totalorder %s22, 0
      %p64 = por %p62, %p63
      %p65 = scmp.ne.s32.totalorder %s53, %s54
      %p66 = scmp.eq.s32.totalorder %s23, 1
      %p67 = por %p65, %p66
      %p69 = scmp.ne.s32.totalorder %s54, %s68
      %p70 = scmp.eq.s32.totalorder %s23, 0
      %p71 = por %p69, %p70
      %s73 = sadd.s32 %s72, 1
      %p76 = scmp.eq.s32.totalorder %s17, 1
      %p77 = scmp.ne.s32.totalorder %s72, %s74
      %p78 = scmp.eq.s32.totalorder %s17, 0
      %p79 = por %p77, %p78
      %p80 = scmp.ne.s32.totalorder %s72, %s74
      %p81 = scmp.eq.s32.totalorder %s22, 1
      %p82 = por %p80, %p81
      %p83 = scmp.ne.s32.totalorder %s74, %s75
      %p84 = scmp.eq.s32.totalorder %s22, 0
      %p85 = por %p83, %p84
      %p86 = scmp.ne.s32.totalorder %s74, %s75
      %p87 = scmp.eq.s32.totalorder %s23, 1
      %p88 = por %p86, %p87
      %p90 = scmp.ne.s32.totalorder %s75, %s89
      %p91 = scmp.eq.s32.totalorder %s23, 0
      %p92 = por %p90, %p91
      %s93 = ssub.s32 %s17, %s24
      %p94 = scmp.eq.s32.totalorder %s93, 0
      %s96 = sadd.s32 %s95, 1
      %s97 = scalar_select %p94, %s95, %s96
      %p100 = pneg %p94
      %p101 = scmp.eq.s32.totalorder %s17, 1
      %p102 = por %p100, %p101
      %p103 = scmp.ne.s32.totalorder %s95, %s98
      %p104 = scmp.eq.s32.totalorder %s17, 0
      %p105 = por %p103, %p104
      %p106 = scmp.ne.s32.totalorder %s95, %s98
      %p107 = scmp.eq.s32.totalorder %s22, 1
      %p108 = por %p106, %p107
      %p109 = scmp.ne.s32.totalorder %s98, %s99
      %p110 = scmp.eq.s32.totalorder %s22, 0
      %p111 = por %p109, %p110
      %p112 = scmp.ne.s32.totalorder %s98, %s99
      %p113 = scmp.eq.s32.totalorder %s23, 1
      %p114 = por %p112, %p113
      %p116 = scmp.ne.s32.totalorder %s99, %s115
      %p117 = scmp.eq.s32.totalorder %s23, 0
      %p118 = por %p116, %p117
      %s119 = ssub.s32 %s17, %s24
      %p120 = scmp.eq.s32.totalorder %s119, 0
      %s122 = sadd.s32 %s121, 1
      %s123 = scalar_select %p120, %s121, %s122
      %p126 = pneg %p120
      %p127 = scmp.eq.s32.totalorder %s17, 1
      %p128 = por %p126, %p127
      %p129 = scmp.ne.s32.totalorder %s121, %s124
      %p130 = scmp.eq.s32.totalorder %s17, 0
      %p131 = por %p129, %p130
      %p132 = scmp.ne.s32.totalorder %s121, %s124
      %p133 = scmp.eq.s32.totalorder %s22, 1
      %p134 = por %p132, %p133
      %p135 = scmp.ne.s32.totalorder %s124, %s125
      %p136 = scmp.eq.s32.totalorder %s22, 0
      %p137 = por %p135, %p136
      %p138 = scmp.ne.s32.totalorder %s124, %s125
      %p139 = scmp.eq.s32.totalorder %s23, 1
      %p140 = por %p138, %p139
      %p142 = scmp.ne.s32.totalorder %s125, %s141
      %p143 = scmp.eq.s32.totalorder %s23, 0
      %p144 = por %p142, %p143
      %p145 = scmp.le.s32.totalorder 1, %s17
      %p146 = scmp.lt.s32.totalorder %s17, 3
      %p147 = pnand %p145, %p146
      %p148 = pneg %p147
      // Predicated region
      $region9: #{tpu_custom_call.1} parent=5 // pred_check
        _
      $region10: #{tpu_custom_call.1} parent=5 // pred_check_branch
        %150 = sbr.rel (%p147) target = $region12
      $region11: #{tpu_custom_call.1} parent=5 // pred_region
        %s151 = ssub.s32 %s17, 1
        // Predicated region
        $region13: #{tpu_custom_call.1} parent=11 // pred_check
          %p152 = pneg %p64
        $region14: #{tpu_custom_call.1} parent=11 // pred_check_branch
          %154 = sbr.rel (%p152) target = $region16
        $region15: #{tpu_custom_call.1} parent=11 // pred_region
          _
        $region16: #{tpu_custom_call.1} parent=11 // pred_fallthru
          _
        // Predicated region
        $region17: #{tpu_custom_call.1} parent=11 // pred_check
          %p155 = pneg %p85
        $region18: #{tpu_custom_call.1} parent=11 // pred_check_branch
          %157 = sbr.rel (%p155) target = $region20
        $region19: #{tpu_custom_call.1} parent=11 // pred_region
          _
        $region20: #{tpu_custom_call.1} parent=11 // pred_fallthru
          _
      $region12: #{tpu_custom_call.1} parent=5 // pred_fallthru
        _
      %p158 = scmp.lt.s32.totalorder %s17, 2
      // Predicated region
      $region21: #{tpu_custom_call.1} parent=5 // pred_check
        %p159 = pneg %p158
      $region22: #{tpu_custom_call.1} parent=5 // pred_check_branch
        %161 = sbr.rel (%p159) target = $region24
      $region23: #{tpu_custom_call.1} parent=5 // pred_region
        // Predicated region
        $region25: #{tpu_custom_call.1} parent=23 // pred_check
          %p162 = pneg %p37
        $region26: #{tpu_custom_call.1} parent=23 // pred_check_branch
          %164 = sbr.rel (%p162) target = $region28
        $region27: #{tpu_custom_call.1} parent=23 // pred_region
          %s165 = smul.u32 32, %s17
          %p166 = scmp.lt.s32.totalorder %s165, 63
          %s167 = scalar_select %p166, %s165, 63
          %s168 = smul.addr %s167, 8
          %s169 = scalar_lea.vmem %s0, %s168
          %s170 = smul.u32 32, %s17
        $region28: #{tpu_custom_call.1} parent=23 // pred_fallthru
          _
      $region24: #{tpu_custom_call.1} parent=5 // pred_fallthru
        _
      %p171 = scmp.le.s32.totalorder 1, %s17
      %p172 = scmp.lt.s32.totalorder %s17, 3
      %p173 = pnand %p171, %p172
      %p174 = pneg %p173
      // Predicated region
      $region29: #{tpu_custom_call.1} parent=5 // pred_check
        _
      $region30: #{tpu_custom_call.1} parent=5 // pred_check_branch
        %176 = sbr.rel (%p173) target = $region32
      $region31: #{tpu_custom_call.1} parent=5 // pred_region
        %s177 = ssub.s32 %s17, 1
        %s178 = smul.u32 32, %s22
        %p179 = scmp.lt.s32.totalorder %s178, 63
        %s180 = scalar_select %p179, %s178, 63
        %s181 = smul.addr %s180, 8
        %s182 = scalar_lea.vmem %s0, %s181
        %p183 = pneg %p43
        %p184 = pneg %p40
        %p185 = pneg %p64
        %p186 = pneg %p61
        %p187 = pneg %p85
        %p188 = pneg %p82
        %p189 = pneg %p111
        %p190 = pneg %p108
        %s191 = sand.u32 %s98, 1
        %s192 = scalar_lea.sflag [#allocation3], %s191
        %s193 = sand.u32 %s98, 1
        %s194 = smul.addr %s193, 256
        %s195 = scalar_lea.vmem [#allocation2], %s194
        %p196 = pneg %p137
        %p197 = pneg %p134
        %s198 = sand.u32 %s124, 1
        %s199 = scalar_lea.sflag [#allocation5], %s198
        %s200 = sand.u32 %s124, 1
        %s201 = smul.addr %s200, 256
        %s202 = scalar_lea.vmem [#allocation4], %s201
        %s203 = smul.u32 32, %s22
        %p204 = scmp.lt.s32.totalorder %s203, 63
        %s205 = scalar_select %p204, %s203, 63
        %s206 = smul.addr %s205, 8
        %s207 = scalar_lea.vmem %s0, %s206
        %s208 = smul.u32 32, %s22
        %s209 = smul.u32 32, %s22
        %s210 = smul.u32 32, %s22
        %v211 = vld [vmem:[%s207] sm:$0xff]
        %v212 = vld [vmem:[%s207 + $0x8] sm:$0xff]
        %v213 = vld [vmem:[%s207 + $0x10] sm:$0xff]
        %v214 = vld [vmem:[%s207 + $0x18] sm:$0xff]
        %v215 = vld [vmem:[%s207 + $0x20] sm:$0xff]
        %v216 = vld [vmem:[%s207 + $0x28] sm:$0xff]
        %v217 = vld [vmem:[%s207 + $0x30] sm:$0xff]
        %v218 = vld [vmem:[%s207 + $0x38] sm:$0xff]
        %v219 = vld [vmem:[%s207 + $0x40] sm:$0xff]
        %v220 = vld [vmem:[%s207 + $0x48] sm:$0xff]
        %v221 = vld [vmem:[%s207 + $0x50] sm:$0xff]
        %v222 = vld [vmem:[%s207 + $0x58] sm:$0xff]
        %v223 = vld [vmem:[%s207 + $0x60] sm:$0xff]
        %v224 = vld [vmem:[%s207 + $0x68] sm:$0xff]
        %v225 = vld [vmem:[%s207 + $0x70] sm:$0xff]
        %v226 = vld [vmem:[%s207 + $0x78] sm:$0xff]
        %v227 = vld [vmem:[%s207 + $0x80] sm:$0xff]
        %v228 = vld [vmem:[%s207 + $0x88] sm:$0xff]
        %v229 = vld [vmem:[%s207 + $0x90] sm:$0xff]
        %v230 = vld [vmem:[%s207 + $0x98] sm:$0xff]
        %v231 = vld [vmem:[%s207 + $0xa0] sm:$0xff]
        %v232 = vld [vmem:[%s207 + $0xa8] sm:$0xff]
        %v233 = vld [vmem:[%s207 + $0xb0] sm:$0xff]
        %v234 = vld [vmem:[%s207 + $0xb8] sm:$0xff]
        %v235 = vld [vmem:[%s207 + $0xc0] sm:$0xff]
        %v236 = vld [vmem:[%s207 + $0xc8] sm:$0xff]
        %v237 = vld [vmem:[%s207 + $0xd0] sm:$0xff]
        %v238 = vld [vmem:[%s207 + $0xd8] sm:$0xff]
        %v239 = vld [vmem:[%s207 + $0xe0] sm:$0xff]
        %v240 = vld [vmem:[%s207 + $0xe8] sm:$0xff]
        %v241 = vld [vmem:[%s207 + $0xf0] sm:$0xff]
        %v242 = vld [vmem:[%s207 + $0xf8] sm:$0xff]
        %v243 = vld [vmem:[%s1] sm:$0xff]
        %v244 = vld [vmem:[%s2] sm:$0x3]
        %v246 = vperm.slane %v244, 0
        %v247 = vperm.slane %v244, 1
        %251 = vst [vmem:[#allocation1] ss:$2 sm:$0xff] %v243
        %v252 = vld.sshfl [vmem:[#allocation1] sm:$0xff pattern:$0x75316420]
        %v253 = vld.sshfl [vmem:[#allocation1 + $0x8] sm:$0xff pattern:$0x75316420]
        %vm254 = vcmask 31744
        %v256 = vsel %vm254, %v211, 0
        %v259 = vsel %vm254, %v212, 0
        %v262 = vsel %vm254, %v213, 0
        %v265 = vsel %vm254, %v214, 0
        %v268 = vsel %vm254, %v215, 0
        %v271 = vsel %vm254, %v216, 0
        %v274 = vsel %vm254, %v217, 0
        %v277 = vsel %vm254, %v218, 0
        %v280 = vsel %vm254, %v219, 0
        %v283 = vsel %vm254, %v220, 0
        %v286 = vsel %vm254, %v221, 0
        %v289 = vsel %vm254, %v222, 0
        %v292 = vsel %vm254, %v223, 0
        %v295 = vsel %vm254, %v224, 0
        %v298 = vsel %vm254, %v225, 0
        %v301 = vsel %vm254, %v226, 0
        %v304 = vsel %vm254, %v227, 0
        %v307 = vsel %vm254, %v228, 0
        %v310 = vsel %vm254, %v229, 0
        %v313 = vsel %vm254, %v230, 0
        %v316 = vsel %vm254, %v231, 0
        %v319 = vsel %vm254, %v232, 0
        %v322 = vsel %vm254, %v233, 0
        %v325 = vsel %vm254, %v234, 0
        %v328 = vsel %vm254, %v235, 0
        %v331 = vsel %vm254, %v236, 0
        %v334 = vsel %vm254, %v237, 0
        %v337 = vsel %vm254, %v238, 0
        %v340 = vsel %vm254, %v239, 0
        %v343 = vsel %vm254, %v240, 0
        %v346 = vsel %vm254, %v241, 0
        %v349 = vsel %vm254, %v242, 0
        %vm351 = vcmask 1043456
        %v352 = vsel %vm351, %v252, 0
        %v354 = vsel %vm351, %v253, 0
        %356 = vmatpush.msra.mxu0 0.0
        %357 = vmatpush.msra.mxu0 0.0
        %358 = vmatpush.msra.mxu0 0.0
        %359 = vmatpush.msra.mxu0 0.0
        %360 = vmatpush.msra.mxu0 0.0
        %361 = vmatpush.msra.mxu0 0.0
        %362 = vmatpush.msra.mxu0 0.0
        %363 = vmatpush.msra.mxu0 0.0
        %364 = vmatpush.msra.mxu0 0.0
        %365 = vmatpush.msra.mxu0 0.0
        %366 = vmatpush.msra.mxu0 0.0
        %367 = vmatpush.msra.mxu0 0.0
        %368 = vmatpush.msra.mxu0 0.0
        %369 = vmatpush.msra.mxu0 0.0
        %370 = vmatpush.msra.mxu0 0.0
        %371 = vmatpush.msra.mxu0 %v352
        %372 = vmatmul.f32.gmra.mxu0 %v256
        %v373 = vpop.f32.mrf.mxu0
        %v374 = vadd.f32 %v246, %v373
        %375 = vmatmul.f32.gmra.mxu0 %v259
        %v376 = vpop.f32.mrf.mxu0
        %v377 = vadd.f32 %v246, %v376
        %378 = vmatmul.f32.gmra.mxu0 %v262
        %v379 = vpop.f32.mrf.mxu0
        %v380 = vadd.f32 %v246, %v379
        %381 = vmatmul.f32.gmra.mxu0 %v265
        %v382 = vpop.f32.mrf.mxu0
        %v383 = vadd.f32 %v246, %v382
        %384 = vmatmul.f32.gmra.mxu0 %v268
        %v385 = vpop.f32.mrf.mxu0
        %v386 = vadd.f32 %v246, %v385
        %387 = vmatmul.f32.gmra.mxu0 %v271
        %v388 = vpop.f32.mrf.mxu0
        %v389 = vadd.f32 %v246, %v388
        %390 = vmatmul.f32.gmra.mxu0 %v274
        %v391 = vpop.f32.mrf.mxu0
        %v392 = vadd.f32 %v246, %v391
        %393 = vmatmul.f32.gmra.mxu0 %v277
        %v394 = vpop.f32.mrf.mxu0
        %v395 = vadd.f32 %v246, %v394
        %396 = vmatmul.f32.gmra.mxu0 %v280
        %v397 = vpop.f32.mrf.mxu0
        %v398 = vadd.f32 %v246, %v397
        %399 = vmatmul.f32.gmra.mxu0 %v283
        %v400 = vpop.f32.mrf.mxu0
        %v401 = vadd.f32 %v246, %v400
        %402 = vmatmul.f32.gmra.mxu0 %v286
        %v403 = vpop.f32.mrf.mxu0
        %v404 = vadd.f32 %v246, %v403
        %405 = vmatmul.f32.gmra.mxu0 %v289
        %v406 = vpop.f32.mrf.mxu0
        %v407 = vadd.f32 %v246, %v406
        %408 = vmatmul.f32.gmra.mxu0 %v292
        %v409 = vpop.f32.mrf.mxu0
        %v410 = vadd.f32 %v246, %v409
        %411 = vmatmul.f32.gmra.mxu0 %v295
        %v412 = vpop.f32.mrf.mxu0
        %v413 = vadd.f32 %v246, %v412
        %414 = vmatmul.f32.gmra.mxu0 %v298
        %v415 = vpop.f32.mrf.mxu0
        %v416 = vadd.f32 %v246, %v415
        %417 = vmatmul.f32.gmra.mxu0 %v301
        %v418 = vpop.f32.mrf.mxu0
        %v419 = vadd.f32 %v246, %v418
        %420 = vmatmul.f32.gmra.mxu0 %v304
        %v421 = vpop.f32.mrf.mxu0
        %v422 = vadd.f32 %v246, %v421
        %423 = vmatmul.f32.gmra.mxu0 %v307
        %v424 = vpop.f32.mrf.mxu0
        %v425 = vadd.f32 %v246, %v424
        %426 = vmatmul.f32.gmra.mxu0 %v310
        %v427 = vpop.f32.mrf.mxu0
        %v428 = vadd.f32 %v246, %v427
        %429 = vmatmul.f32.gmra.mxu0 %v313
        %v430 = vpop.f32.mrf.mxu0
        %v431 = vadd.f32 %v246, %v430
        %432 = vmatmul.f32.gmra.mxu0 %v316
        %v433 = vpop.f32.mrf.mxu0
        %v434 = vadd.f32 %v246, %v433
        %435 = vmatmul.f32.gmra.mxu0 %v319
        %v436 = vpop.f32.mrf.mxu0
        %v437 = vadd.f32 %v246, %v436
        %438 = vmatmul.f32.gmra.mxu0 %v322
        %v439 = vpop.f32.mrf.mxu0
        %v440 = vadd.f32 %v246, %v439
        %441 = vmatmul.f32.gmra.mxu0 %v325
        %v442 = vpop.f32.mrf.mxu0
        %v443 = vadd.f32 %v246, %v442
        %444 = vmatmul.f32.gmra.mxu0 %v328
        %v445 = vpop.f32.mrf.mxu0
        %v446 = vadd.f32 %v246, %v445
        %447 = vmatmul.f32.gmra.mxu0 %v331
        %v448 = vpop.f32.mrf.mxu0
        %v449 = vadd.f32 %v246, %v448
        %450 = vmatmul.f32.gmra.mxu0 %v334
        %v451 = vpop.f32.mrf.mxu0
        %v452 = vadd.f32 %v246, %v451
        %453 = vmatmul.f32.gmra.mxu0 %v337
        %v454 = vpop.f32.mrf.mxu0
        %v455 = vadd.f32 %v246, %v454
        %456 = vmatmul.f32.gmra.mxu0 %v340
        %v457 = vpop.f32.mrf.mxu0
        %v458 = vadd.f32 %v246, %v457
        %459 = vmatmul.f32.gmra.mxu0 %v343
        %v460 = vpop.f32.mrf.mxu0
        %v461 = vadd.f32 %v246, %v460
        %462 = vmatmul.f32.gmra.mxu0 %v346
        %v463 = vpop.f32.mrf.mxu0
        %v464 = vadd.f32 %v246, %v463
        %465 = vmatmul.f32.gmra.mxu0 %v349
        %v466 = vpop.f32.mrf.mxu0
        %v467 = vadd.f32 %v246, %v466
        %468 = vdwg.mxu0
        %469 = vmatpush.msra.mxu0 0.0
        %470 = vmatpush.msra.mxu0 0.0
        %471 = vmatpush.msra.mxu0 0.0
        %472 = vmatpush.msra.mxu0 0.0
        %473 = vmatpush.msra.mxu0 0.0
        %474 = vmatpush.msra.mxu0 0.0
        %475 = vmatpush.msra.mxu0 0.0
        %476 = vmatpush.msra.mxu0 0.0
        %477 = vmatpush.msra.mxu0 0.0
        %478 = vmatpush.msra.mxu0 0.0
        %479 = vmatpush.msra.mxu0 0.0
        %480 = vmatpush.msra.mxu0 0.0
        %481 = vmatpush.msra.mxu0 0.0
        %482 = vmatpush.msra.mxu0 0.0
        %483 = vmatpush.msra.mxu0 0.0
        %484 = vmatpush.msra.mxu0 %v354
        %485 = vmatmul.f32.gmra.mxu0 %v256
        %v486 = vpop.f32.mrf.mxu0
        %v487 = vadd.f32 %v247, %v486
        %488 = vmatmul.f32.gmra.mxu0 %v259
        %v489 = vpop.f32.mrf.mxu0
        %v490 = vadd.f32 %v247, %v489
        %491 = vmatmul.f32.gmra.mxu0 %v262
        %v492 = vpop.f32.mrf.mxu0
        %v493 = vadd.f32 %v247, %v492
        %494 = vmatmul.f32.gmra.mxu0 %v265
        %v495 = vpop.f32.mrf.mxu0
        %v496 = vadd.f32 %v247, %v495
        %497 = vmatmul.f32.gmra.mxu0 %v268
        %v498 = vpop.f32.mrf.mxu0
        %v499 = vadd.f32 %v247, %v498
        %500 = vmatmul.f32.gmra.mxu0 %v271
        %v501 = vpop.f32.mrf.mxu0
        %v502 = vadd.f32 %v247, %v501
        %503 = vmatmul.f32.gmra.mxu0 %v274
        %v504 = vpop.f32.mrf.mxu0
        %v505 = vadd.f32 %v247, %v504
        %506 = vmatmul.f32.gmra.mxu0 %v277
        %v507 = vpop.f32.mrf.mxu0
        %v508 = vadd.f32 %v247, %v507
        %509 = vmatmul.f32.gmra.mxu0 %v280
        %v510 = vpop.f32.mrf.mxu0
        %v511 = vadd.f32 %v247, %v510
        %512 = vmatmul.f32.gmra.mxu0 %v283
        %v513 = vpop.f32.mrf.mxu0
        %v514 = vadd.f32 %v247, %v513
        %515 = vmatmul.f32.gmra.mxu0 %v286
        %v516 = vpop.f32.mrf.mxu0
        %v517 = vadd.f32 %v247, %v516
        %518 = vmatmul.f32.gmra.mxu0 %v289
        %v519 = vpop.f32.mrf.mxu0
        %v520 = vadd.f32 %v247, %v519
        %521 = vmatmul.f32.gmra.mxu0 %v292
        %v522 = vpop.f32.mrf.mxu0
        %v523 = vadd.f32 %v247, %v522
        %524 = vmatmul.f32.gmra.mxu0 %v295
        %v525 = vpop.f32.mrf.mxu0
        %v526 = vadd.f32 %v247, %v525
        %527 = vmatmul.f32.gmra.mxu0 %v298
        %v528 = vpop.f32.mrf.mxu0
        %v529 = vadd.f32 %v247, %v528
        %530 = vmatmul.f32.gmra.mxu0 %v301
        %v531 = vpop.f32.mrf.mxu0
        %v532 = vadd.f32 %v247, %v531
        %533 = vmatmul.f32.gmra.mxu0 %v304
        %v534 = vpop.f32.mrf.mxu0
        %v535 = vadd.f32 %v247, %v534
        %536 = vmatmul.f32.gmra.mxu0 %v307
        %v537 = vpop.f32.mrf.mxu0
        %v538 = vadd.f32 %v247, %v537
        %539 = vmatmul.f32.gmra.mxu0 %v310
        %v540 = vpop.f32.mrf.mxu0
        %v541 = vadd.f32 %v247, %v540
        %542 = vmatmul.f32.gmra.mxu0 %v313
        %v543 = vpop.f32.mrf.mxu0
        %v544 = vadd.f32 %v247, %v543
        %545 = vmatmul.f32.gmra.mxu0 %v316
        %v546 = vpop.f32.mrf.mxu0
        %v547 = vadd.f32 %v247, %v546
        %548 = vmatmul.f32.gmra.mxu0 %v319
        %v549 = vpop.f32.mrf.mxu0
        %v550 = vadd.f32 %v247, %v549
        %551 = vmatmul.f32.gmra.mxu0 %v322
        %v552 = vpop.f32.mrf.mxu0
        %v553 = vadd.f32 %v247, %v552
        %554 = vmatmul.f32.gmra.mxu0 %v325
        %v555 = vpop.f32.mrf.mxu0
        %v556 = vadd.f32 %v247, %v555
        %557 = vmatmul.f32.gmra.mxu0 %v328
        %v558 = vpop.f32.mrf.mxu0
        %v559 = vadd.f32 %v247, %v558
        %560 = vmatmul.f32.gmra.mxu0 %v331
        %v561 = vpop.f32.mrf.mxu0
        %v562 = vadd.f32 %v247, %v561
        %563 = vmatmul.f32.gmra.mxu0 %v334
        %v564 = vpop.f32.mrf.mxu0
        %v565 = vadd.f32 %v247, %v564
        %566 = vmatmul.f32.gmra.mxu0 %v337
        %v567 = vpop.f32.mrf.mxu0
        %v568 = vadd.f32 %v247, %v567
        %569 = vmatmul.f32.gmra.mxu0 %v340
        %v570 = vpop.f32.mrf.mxu0
        %v571 = vadd.f32 %v247, %v570
        %572 = vmatmul.f32.gmra.mxu0 %v343
        %v573 = vpop.f32.mrf.mxu0
        %v574 = vadd.f32 %v247, %v573
        %575 = vmatmul.f32.gmra.mxu0 %v346
        %v576 = vpop.f32.mrf.mxu0
        %v577 = vadd.f32 %v247, %v576
        %578 = vmatmul.f32.gmra.mxu0 %v349
        %v579 = vpop.f32.mrf.mxu0
        %v580 = vadd.f32 %v247, %v579
        %581 = vdwg.mxu0
        %v582 = vxor.u32 %v374, 2147483648
        %v583 = vxor.u32 %v487, 2147483648
        %v584 = vxor.u32 %v377, 2147483648
        %v585 = vxor.u32 %v490, 2147483648
        %v586 = vxor.u32 %v380, 2147483648
        %v587 = vxor.u32 %v493, 2147483648
        %v588 = vxor.u32 %v383, 2147483648
        %v589 = vxor.u32 %v496, 2147483648
        %v590 = vxor.u32 %v386, 2147483648
        %v591 = vxor.u32 %v499, 2147483648
        %v592 = vxor.u32 %v389, 2147483648
        %v593 = vxor.u32 %v502, 2147483648
        %v594 = vxor.u32 %v392, 2147483648
        %v595 = vxor.u32 %v505, 2147483648
        %v596 = vxor.u32 %v395, 2147483648
        %v597 = vxor.u32 %v508, 2147483648
        %v598 = vxor.u32 %v398, 2147483648
        %v599 = vxor.u32 %v511, 2147483648
        %v600 = vxor.u32 %v401, 2147483648
        %v601 = vxor.u32 %v514, 2147483648
        %v602 = vxor.u32 %v404, 2147483648
        %v603 = vxor.u32 %v517, 2147483648
        %v604 = vxor.u32 %v407, 2147483648
        %v605 = vxor.u32 %v520, 2147483648
        %v606 = vxor.u32 %v410, 2147483648
        %v607 = vxor.u32 %v523, 2147483648
        %v608 = vxor.u32 %v413, 2147483648
        %v609 = vxor.u32 %v526, 2147483648
        %v610 = vxor.u32 %v416, 2147483648
        %v611 = vxor.u32 %v529, 2147483648
        %v612 = vxor.u32 %v419, 2147483648
        %v613 = vxor.u32 %v532, 2147483648
        %v614 = vxor.u32 %v422, 2147483648
        %v615 = vxor.u32 %v535, 2147483648
        %v616 = vxor.u32 %v425, 2147483648
        %v617 = vxor.u32 %v538, 2147483648
        %v618 = vxor.u32 %v428, 2147483648
        %v619 = vxor.u32 %v541, 2147483648
        %v620 = vxor.u32 %v431, 2147483648
        %v621 = vxor.u32 %v544, 2147483648
        %v622 = vxor.u32 %v434, 2147483648
        %v623 = vxor.u32 %v547, 2147483648
        %v624 = vxor.u32 %v437, 2147483648
        %v625 = vxor.u32 %v550, 2147483648
        %v626 = vxor.u32 %v440, 2147483648
        %v627 = vxor.u32 %v553, 2147483648
        %v628 = vxor.u32 %v443, 2147483648
        %v629 = vxor.u32 %v556, 2147483648
        %v630 = vxor.u32 %v446, 2147483648
        %v631 = vxor.u32 %v559, 2147483648
        %v632 = vxor.u32 %v449, 2147483648
        %v633 = vxor.u32 %v562, 2147483648
        %v634 = vxor.u32 %v452, 2147483648
        %v635 = vxor.u32 %v565, 2147483648
        %v636 = vxor.u32 %v455, 2147483648
        %v637 = vxor.u32 %v568, 2147483648
        %v638 = vxor.u32 %v458, 2147483648
        %v639 = vxor.u32 %v571, 2147483648
        %v640 = vxor.u32 %v461, 2147483648
        %v641 = vxor.u32 %v574, 2147483648
        %v642 = vxor.u32 %v464, 2147483648
        %v643 = vxor.u32 %v577, 2147483648
        %v644 = vxor.u32 %v467, 2147483648
        %v645 = vxor.u32 %v580, 2147483648
        %v646 = vmul.f32 %v582, 1.442695
        %v647 = vpow.pop %v646
        %v648 = vmul.f32 %v583, 1.442695
        %v649 = vpow.pop %v648
        %v650 = vmul.f32 %v584, 1.442695
        %v651 = vpow.pop %v650
        %v652 = vmul.f32 %v585, 1.442695
        %v653 = vpow.pop %v652
        %v654 = vmul.f32 %v586, 1.442695
        %v655 = vpow.pop %v654
        %v656 = vmul.f32 %v587, 1.442695
        %v657 = vpow.pop %v656
        %v658 = vmul.f32 %v588, 1.442695
        %v659 = vpow.pop %v658
        %v660 = vmul.f32 %v589, 1.442695
        %v661 = vpow.pop %v660
        %v662 = vmul.f32 %v590, 1.442695
        %v663 = vpow.pop %v662
        %v664 = vmul.f32 %v591, 1.442695
        %v665 = vpow.pop %v664
        %v666 = vmul.f32 %v592, 1.442695
        %v667 = vpow.pop %v666
        %v668 = vmul.f32 %v593, 1.442695
        %v669 = vpow.pop %v668
        %v670 = vmul.f32 %v594, 1.442695
        %v671 = vpow.pop %v670
        %v672 = vmul.f32 %v595, 1.442695
        %v673 = vpow.pop %v672
        %v674 = vmul.f32 %v596, 1.442695
        %v675 = vpow.pop %v674
        %v676 = vmul.f32 %v597, 1.442695
        %v677 = vpow.pop %v676
        %v678 = vmul.f32 %v598, 1.442695
        %v679 = vpow.pop %v678
        %v680 = vmul.f32 %v599, 1.442695
        %v681 = vpow.pop %v680
        %v682 = vmul.f32 %v600, 1.442695
        %v683 = vpow.pop %v682
        %v684 = vmul.f32 %v601, 1.442695
        %v685 = vpow.pop %v684
        %v686 = vmul.f32 %v602, 1.442695
        %v687 = vpow.pop %v686
        %v688 = vmul.f32 %v603, 1.442695
        %v689 = vpow.pop %v688
        %v690 = vmul.f32 %v604, 1.442695
        %v691 = vpow.pop %v690
        %v692 = vmul.f32 %v605, 1.442695
        %v693 = vpow.pop %v692
        %v694 = vmul.f32 %v606, 1.442695
        %v695 = vpow.pop %v694
        %v696 = vmul.f32 %v607, 1.442695
        %v697 = vpow.pop %v696
        %v698 = vmul.f32 %v608, 1.442695
        %v699 = vpow.pop %v698
        %v700 = vmul.f32 %v609, 1.442695
        %v701 = vpow.pop %v700
        %v702 = vmul.f32 %v610, 1.442695
        %v703 = vpow.pop %v702
        %v704 = vmul.f32 %v611, 1.442695
        %v705 = vpow.pop %v704
        %v706 = vmul.f32 %v612, 1.442695
        %v707 = vpow.pop %v706
        %v708 = vmul.f32 %v613, 1.442695
        %v709 = vpow.pop %v708
        %v710 = vmul.f32 %v614, 1.442695
        %v711 = vpow.pop %v710
        %v712 = vmul.f32 %v615, 1.442695
        %v713 = vpow.pop %v712
        %v714 = vmul.f32 %v616, 1.442695
        %v715 = vpow.pop %v714
        %v716 = vmul.f32 %v617, 1.442695
        %v717 = vpow.pop %v716
        %v718 = vmul.f32 %v618, 1.442695
        %v719 = vpow.pop %v718
        %v720 = vmul.f32 %v619, 1.442695
        %v721 = vpow.pop %v720
        %v722 = vmul.f32 %v620, 1.442695
        %v723 = vpow.pop %v722
        %v724 = vmul.f32 %v621, 1.442695
        %v725 = vpow.pop %v724
        %v726 = vmul.f32 %v622, 1.442695
        %v727 = vpow.pop %v726
        %v728 = vmul.f32 %v623, 1.442695
        %v729 = vpow.pop %v728
        %v730 = vmul.f32 %v624, 1.442695
        %v731 = vpow.pop %v730
        %v732 = vmul.f32 %v625, 1.442695
        %v733 = vpow.pop %v732
        %v734 = vmul.f32 %v626, 1.442695
        %v735 = vpow.pop %v734
        %v736 = vmul.f32 %v627, 1.442695
        %v737 = vpow.pop %v736
        %v738 = vmul.f32 %v628, 1.442695
        %v739 = vpow.pop %v738
        %v740 = vmul.f32 %v629, 1.442695
        %v741 = vpow.pop %v740
        %v742 = vmul.f32 %v630, 1.442695
        %v743 = vpow.pop %v742
        %v744 = vmul.f32 %v631, 1.442695
        %v745 = vpow.pop %v744
        %v746 = vmul.f32 %v632, 1.442695
        %v747 = vpow.pop %v746
        %v748 = vmul.f32 %v633, 1.442695
        %v749 = vpow.pop %v748
        %v750 = vmul.f32 %v634, 1.442695
        %v751 = vpow.pop %v750
        %v752 = vmul.f32 %v635, 1.442695
        %v753 = vpow.pop %v752
        %v754 = vmul.f32 %v636, 1.442695
        %v755 = vpow.pop %v754
        %v756 = vmul.f32 %v637, 1.442695
        %v757 = vpow.pop %v756
        %v758 = vmul.f32 %v638, 1.442695
        %v759 = vpow.pop %v758
        %v760 = vmul.f32 %v639, 1.442695
        %v761 = vpow.pop %v760
        %v762 = vmul.f32 %v640, 1.442695
        %v763 = vpow.pop %v762
        %v764 = vmul.f32 %v641, 1.442695
        %v765 = vpow.pop %v764
        %v766 = vmul.f32 %v642, 1.442695
        %v767 = vpow.pop %v766
        %v768 = vmul.f32 %v643, 1.442695
        %v769 = vpow.pop %v768
        %v770 = vmul.f32 %v644, 1.442695
        %v771 = vpow.pop %v770
        %v772 = vmul.f32 %v645, 1.442695
        %v773 = vpow.pop %v772
        %v774 = vadd.f32 %v647, 1.0
        %v775 = vadd.f32 %v649, 1.0
        %v776 = vadd.f32 %v651, 1.0
        %v777 = vadd.f32 %v653, 1.0
        %v778 = vadd.f32 %v655, 1.0
        %v779 = vadd.f32 %v657, 1.0
        %v780 = vadd.f32 %v659, 1.0
        %v781 = vadd.f32 %v661, 1.0
        %v782 = vadd.f32 %v663, 1.0
        %v783 = vadd.f32 %v665, 1.0
        %v784 = vadd.f32 %v667, 1.0
        %v785 = vadd.f32 %v669, 1.0
        %v786 = vadd.f32 %v671, 1.0
        %v787 = vadd.f32 %v673, 1.0
        %v788 = vadd.f32 %v675, 1.0
        %v789 = vadd.f32 %v677, 1.0
        %v790 = vadd.f32 %v679, 1.0
        %v791 = vadd.f32 %v681, 1.0
        %v792 = vadd.f32 %v683, 1.0
        %v793 = vadd.f32 %v685, 1.0
        %v794 = vadd.f32 %v687, 1.0
        %v795 = vadd.f32 %v689, 1.0
        %v796 = vadd.f32 %v691, 1.0
        %v797 = vadd.f32 %v693, 1.0
        %v798 = vadd.f32 %v695, 1.0
        %v799 = vadd.f32 %v697, 1.0
        %v800 = vadd.f32 %v699, 1.0
        %v801 = vadd.f32 %v701, 1.0
        %v802 = vadd.f32 %v703, 1.0
        %v803 = vadd.f32 %v705, 1.0
        %v804 = vadd.f32 %v707, 1.0
        %v805 = vadd.f32 %v709, 1.0
        %v806 = vadd.f32 %v711, 1.0
        %v807 = vadd.f32 %v713, 1.0
        %v808 = vadd.f32 %v715, 1.0
        %v809 = vadd.f32 %v717, 1.0
        %v810 = vadd.f32 %v719, 1.0
        %v811 = vadd.f32 %v721, 1.0
        %v812 = vadd.f32 %v723, 1.0
        %v813 = vadd.f32 %v725, 1.0
        %v814 = vadd.f32 %v727, 1.0
        %v815 = vadd.f32 %v729, 1.0
        %v816 = vadd.f32 %v731, 1.0
        %v817 = vadd.f32 %v733, 1.0
        %v818 = vadd.f32 %v735, 1.0
        %v819 = vadd.f32 %v737, 1.0
        %v820 = vadd.f32 %v739, 1.0
        %v821 = vadd.f32 %v741, 1.0
        %v822 = vadd.f32 %v743, 1.0
        %v823 = vadd.f32 %v745, 1.0
        %v824 = vadd.f32 %v747, 1.0
        %v825 = vadd.f32 %v749, 1.0
        %v826 = vadd.f32 %v751, 1.0
        %v827 = vadd.f32 %v753, 1.0
        %v828 = vadd.f32 %v755, 1.0
        %v829 = vadd.f32 %v757, 1.0
        %v830 = vadd.f32 %v759, 1.0
        %v831 = vadd.f32 %v761, 1.0
        %v832 = vadd.f32 %v763, 1.0
        %v833 = vadd.f32 %v765, 1.0
        %v834 = vadd.f32 %v767, 1.0
        %v835 = vadd.f32 %v769, 1.0
        %v836 = vadd.f32 %v771, 1.0
        %v837 = vadd.f32 %v773, 1.0
        %v838 = vrcp.pop %v774
        %v839 = vmul.f32 %v774, %v838
        %v840 = vsub.f32 1.0, %v839
        %v841 = vmul.f32 %v838, %v840
        %v842 = vadd.f32 %v838, %v841
        %vm843 = vweird.f32 %v774
        %vm844 = vweird.f32 %v838
        %vm845 = vmor %vm843, %vm844
        %v846 = vsel %vm845, %v838, %v842
        %v847 = vand.u32 2147483647, %v774
        %vm848 = vcmp.eq.f32.partialorder %v847, 8.507059e+37
        %v849 = vand.u32 %v774, 2147483648
        %v850 = vor.u32 1.1754944e-38, %v849
        %v851 = vsel %vm848, %v850, %v846
        %v852 = vmul.f32 1.0, %v851
        %v853 = vrcp.pop %v775
        %v854 = vmul.f32 %v775, %v853
        %v855 = vsub.f32 1.0, %v854
        %v856 = vmul.f32 %v853, %v855
        %v857 = vadd.f32 %v853, %v856
        %vm858 = vweird.f32 %v775
        %vm859 = vweird.f32 %v853
        %vm860 = vmor %vm858, %vm859
        %v861 = vsel %vm860, %v853, %v857
        %v862 = vand.u32 2147483647, %v775
        %vm863 = vcmp.eq.f32.partialorder %v862, 8.507059e+37
        %v864 = vand.u32 %v775, 2147483648
        %v865 = vor.u32 1.1754944e-38, %v864
        %v866 = vsel %vm863, %v865, %v861
        %v867 = vmul.f32 1.0, %v866
        %v868 = vrcp.pop %v776
        %v869 = vmul.f32 %v776, %v868
        %v870 = vsub.f32 1.0, %v869
        %v871 = vmul.f32 %v868, %v870
        %v872 = vadd.f32 %v868, %v871
        %vm873 = vweird.f32 %v776
        %vm874 = vweird.f32 %v868
        %vm875 = vmor %vm873, %vm874
        %v876 = vsel %vm875, %v868, %v872
        %v877 = vand.u32 2147483647, %v776
        %vm878 = vcmp.eq.f32.partialorder %v877, 8.507059e+37
        %v879 = vand.u32 %v776, 2147483648
        %v880 = vor.u32 1.1754944e-38, %v879
        %v881 = vsel %vm878, %v880, %v876
        %v882 = vmul.f32 1.0, %v881
        %v883 = vrcp.pop %v777
        %v884 = vmul.f32 %v777, %v883
        %v885 = vsub.f32 1.0, %v884
        %v886 = vmul.f32 %v883, %v885
        %v887 = vadd.f32 %v883, %v886
        %vm888 = vweird.f32 %v777
        %vm889 = vweird.f32 %v883
        %vm890 = vmor %vm888, %vm889
        %v891 = vsel %vm890, %v883, %v887
        %v892 = vand.u32 2147483647, %v777
        %vm893 = vcmp.eq.f32.partialorder %v892, 8.507059e+37
        %v894 = vand.u32 %v777, 2147483648
        %v895 = vor.u32 1.1754944e-38, %v894
        %v896 = vsel %vm893, %v895, %v891
        %v897 = vmul.f32 1.0, %v896
        %v898 = vrcp.pop %v778
        %v899 = vmul.f32 %v778, %v898
        %v900 = vsub.f32 1.0, %v899
        %v901 = vmul.f32 %v898, %v900
        %v902 = vadd.f32 %v898, %v901
        %vm903 = vweird.f32 %v778
        %vm904 = vweird.f32 %v898
        %vm905 = vmor %vm903, %vm904
        %v906 = vsel %vm905, %v898, %v902
        %v907 = vand.u32 2147483647, %v778
        %vm908 = vcmp.eq.f32.partialorder %v907, 8.507059e+37
        %v909 = vand.u32 %v778, 2147483648
        %v910 = vor.u32 1.1754944e-38, %v909
        %v911 = vsel %vm908, %v910, %v906
        %v912 = vmul.f32 1.0, %v911
        %v913 = vrcp.pop %v779
        %v914 = vmul.f32 %v779, %v913
        %v915 = vsub.f32 1.0, %v914
        %v916 = vmul.f32 %v913, %v915
        %v917 = vadd.f32 %v913, %v916
        %vm918 = vweird.f32 %v779
        %vm919 = vweird.f32 %v913
        %vm920 = vmor %vm918, %vm919
        %v921 = vsel %vm920, %v913, %v917
        %v922 = vand.u32 2147483647, %v779
        %vm923 = vcmp.eq.f32.partialorder %v922, 8.507059e+37
        %v924 = vand.u32 %v779, 2147483648
        %v925 = vor.u32 1.1754944e-38, %v924
        %v926 = vsel %vm923, %v925, %v921
        %v927 = vmul.f32 1.0, %v926
        %v928 = vrcp.pop %v780
        %v929 = vmul.f32 %v780, %v928
        %v930 = vsub.f32 1.0, %v929
        %v931 = vmul.f32 %v928, %v930
        %v932 = vadd.f32 %v928, %v931
        %vm933 = vweird.f32 %v780
        %vm934 = vweird.f32 %v928
        %vm935 = vmor %vm933, %vm934
        %v936 = vsel %vm935, %v928, %v932
        %v937 = vand.u32 2147483647, %v780
        %vm938 = vcmp.eq.f32.partialorder %v937, 8.507059e+37
        %v939 = vand.u32 %v780, 2147483648
        %v940 = vor.u32 1.1754944e-38, %v939
        %v941 = vsel %vm938, %v940, %v936
        %v942 = vmul.f32 1.0, %v941
        %v943 = vrcp.pop %v781
        %v944 = vmul.f32 %v781, %v943
        %v945 = vsub.f32 1.0, %v944
        %v946 = vmul.f32 %v943, %v945
        %v947 = vadd.f32 %v943, %v946
        %vm948 = vweird.f32 %v781
        %vm949 = vweird.f32 %v943
        %vm950 = vmor %vm948, %vm949
        %v951 = vsel %vm950, %v943, %v947
        %v952 = vand.u32 2147483647, %v781
        %vm953 = vcmp.eq.f32.partialorder %v952, 8.507059e+37
        %v954 = vand.u32 %v781, 2147483648
        %v955 = vor.u32 1.1754944e-38, %v954
        %v956 = vsel %vm953, %v955, %v951
        %v957 = vmul.f32 1.0, %v956
        %v958 = vrcp.pop %v782
        %v959 = vmul.f32 %v782, %v958
        %v960 = vsub.f32 1.0, %v959
        %v961 = vmul.f32 %v958, %v960
        %v962 = vadd.f32 %v958, %v961
        %vm963 = vweird.f32 %v782
        %vm964 = vweird.f32 %v958
        %vm965 = vmor %vm963, %vm964
        %v966 = vsel %vm965, %v958, %v962
        %v967 = vand.u32 2147483647, %v782
        %vm968 = vcmp.eq.f32.partialorder %v967, 8.507059e+37
        %v969 = vand.u32 %v782, 2147483648
        %v970 = vor.u32 1.1754944e-38, %v969
        %v971 = vsel %vm968, %v970, %v966
        %v972 = vmul.f32 1.0, %v971
        %v973 = vrcp.pop %v783
        %v974 = vmul.f32 %v783, %v973
        %v975 = vsub.f32 1.0, %v974
        %v976 = vmul.f32 %v973, %v975
        %v977 = vadd.f32 %v973, %v976
        %vm978 = vweird.f32 %v783
        %vm979 = vweird.f32 %v973
        %vm980 = vmor %vm978, %vm979
        %v981 = vsel %vm980, %v973, %v977
        %v982 = vand.u32 2147483647, %v783
        %vm983 = vcmp.eq.f32.partialorder %v982, 8.507059e+37
        %v984 = vand.u32 %v783, 2147483648
        %v985 = vor.u32 1.1754944e-38, %v984
        %v986 = vsel %vm983, %v985, %v981
        %v987 = vmul.f32 1.0, %v986
        %v988 = vrcp.pop %v784
        %v989 = vmul.f32 %v784, %v988
        %v990 = vsub.f32 1.0, %v989
        %v991 = vmul.f32 %v988, %v990
        %v992 = vadd.f32 %v988, %v991
        %vm993 = vweird.f32 %v784
        %vm994 = vweird.f32 %v988
        %vm995 = vmor %vm993, %vm994
        %v996 = vsel %vm995, %v988, %v992
        %v997 = vand.u32 2147483647, %v784
        %vm998 = vcmp.eq.f32.partialorder %v997, 8.507059e+37
        %v999 = vand.u32 %v784, 2147483648
        %v1000 = vor.u32 1.1754944e-38, %v999
        %v1001 = vsel %vm998, %v1000, %v996
        %v1002 = vmul.f32 1.0, %v1001
        %v1003 = vrcp.pop %v785
        %v1004 = vmul.f32 %v785, %v1003
        %v1005 = vsub.f32 1.0, %v1004
        %v1006 = vmul.f32 %v1003, %v1005
        %v1007 = vadd.f32 %v1003, %v1006
        %vm1008 = vweird.f32 %v785
        %vm1009 = vweird.f32 %v1003
        %vm1010 = vmor %vm1008, %vm1009
        %v1011 = vsel %vm1010, %v1003, %v1007
        %v1012 = vand.u32 2147483647, %v785
        %vm1013 = vcmp.eq.f32.partialorder %v1012, 8.507059e+37
        %v1014 = vand.u32 %v785, 2147483648
        %v1015 = vor.u32 1.1754944e-38, %v1014
        %v1016 = vsel %vm1013, %v1015, %v1011
        %v1017 = vmul.f32 1.0, %v1016
        %v1018 = vrcp.pop %v786
        %v1019 = vmul.f32 %v786, %v1018
        %v1020 = vsub.f32 1.0, %v1019
        %v1021 = vmul.f32 %v1018, %v1020
        %v1022 = vadd.f32 %v1018, %v1021
        %vm1023 = vweird.f32 %v786
        %vm1024 = vweird.f32 %v1018
        %vm1025 = vmor %vm1023, %vm1024
        %v1026 = vsel %vm1025, %v1018, %v1022
        %v1027 = vand.u32 2147483647, %v786
        %vm1028 = vcmp.eq.f32.partialorder %v1027, 8.507059e+37
        %v1029 = vand.u32 %v786, 2147483648
        %v1030 = vor.u32 1.1754944e-38, %v1029
        %v1031 = vsel %vm1028, %v1030, %v1026
        %v1032 = vmul.f32 1.0, %v1031
        %v1033 = vrcp.pop %v787
        %v1034 = vmul.f32 %v787, %v1033
        %v1035 = vsub.f32 1.0, %v1034
        %v1036 = vmul.f32 %v1033, %v1035
        %v1037 = vadd.f32 %v1033, %v1036
        %vm1038 = vweird.f32 %v787
        %vm1039 = vweird.f32 %v1033
        %vm1040 = vmor %vm1038, %vm1039
        %v1041 = vsel %vm1040, %v1033, %v1037
        %v1042 = vand.u32 2147483647, %v787
        %vm1043 = vcmp.eq.f32.partialorder %v1042, 8.507059e+37
        %v1044 = vand.u32 %v787, 2147483648
        %v1045 = vor.u32 1.1754944e-38, %v1044
        %v1046 = vsel %vm1043, %v1045, %v1041
        %v1047 = vmul.f32 1.0, %v1046
        %v1048 = vrcp.pop %v788
        %v1049 = vmul.f32 %v788, %v1048
        %v1050 = vsub.f32 1.0, %v1049
        %v1051 = vmul.f32 %v1048, %v1050
        %v1052 = vadd.f32 %v1048, %v1051
        %vm1053 = vweird.f32 %v788
        %vm1054 = vweird.f32 %v1048
        %vm1055 = vmor %vm1053, %vm1054
        %v1056 = vsel %vm1055, %v1048, %v1052
        %v1057 = vand.u32 2147483647, %v788
        %vm1058 = vcmp.eq.f32.partialorder %v1057, 8.507059e+37
        %v1059 = vand.u32 %v788, 2147483648
        %v1060 = vor.u32 1.1754944e-38, %v1059
        %v1061 = vsel %vm1058, %v1060, %v1056
        %v1062 = vmul.f32 1.0, %v1061
        %v1063 = vrcp.pop %v789
        %v1064 = vmul.f32 %v789, %v1063
        %v1065 = vsub.f32 1.0, %v1064
        %v1066 = vmul.f32 %v1063, %v1065
        %v1067 = vadd.f32 %v1063, %v1066
        %vm1068 = vweird.f32 %v789
        %vm1069 = vweird.f32 %v1063
        %vm1070 = vmor %vm1068, %vm1069
        %v1071 = vsel %vm1070, %v1063, %v1067
        %v1072 = vand.u32 2147483647, %v789
        %vm1073 = vcmp.eq.f32.partialorder %v1072, 8.507059e+37
        %v1074 = vand.u32 %v789, 2147483648
        %v1075 = vor.u32 1.1754944e-38, %v1074
        %v1076 = vsel %vm1073, %v1075, %v1071
        %v1077 = vmul.f32 1.0, %v1076
        %v1078 = vrcp.pop %v790
        %v1079 = vmul.f32 %v790, %v1078
        %v1080 = vsub.f32 1.0, %v1079
        %v1081 = vmul.f32 %v1078, %v1080
        %v1082 = vadd.f32 %v1078, %v1081
        %vm1083 = vweird.f32 %v790
        %vm1084 = vweird.f32 %v1078
        %vm1085 = vmor %vm1083, %vm1084
        %v1086 = vsel %vm1085, %v1078, %v1082
        %v1087 = vand.u32 2147483647, %v790
        %vm1088 = vcmp.eq.f32.partialorder %v1087, 8.507059e+37
        %v1089 = vand.u32 %v790, 2147483648
        %v1090 = vor.u32 1.1754944e-38, %v1089
        %v1091 = vsel %vm1088, %v1090, %v1086
        %v1092 = vmul.f32 1.0, %v1091
        %v1093 = vrcp.pop %v791
        %v1094 = vmul.f32 %v791, %v1093
        %v1095 = vsub.f32 1.0, %v1094
        %v1096 = vmul.f32 %v1093, %v1095
        %v1097 = vadd.f32 %v1093, %v1096
        %vm1098 = vweird.f32 %v791
        %vm1099 = vweird.f32 %v1093
        %vm1100 = vmor %vm1098, %vm1099
        %v1101 = vsel %vm1100, %v1093, %v1097
        %v1102 = vand.u32 2147483647, %v791
        %vm1103 = vcmp.eq.f32.partialorder %v1102, 8.507059e+37
        %v1104 = vand.u32 %v791, 2147483648
        %v1105 = vor.u32 1.1754944e-38, %v1104
        %v1106 = vsel %vm1103, %v1105, %v1101
        %v1107 = vmul.f32 1.0, %v1106
        %v1108 = vrcp.pop %v792
        %v1109 = vmul.f32 %v792, %v1108
        %v1110 = vsub.f32 1.0, %v1109
        %v1111 = vmul.f32 %v1108, %v1110
        %v1112 = vadd.f32 %v1108, %v1111
        %vm1113 = vweird.f32 %v792
        %vm1114 = vweird.f32 %v1108
        %vm1115 = vmor %vm1113, %vm1114
        %v1116 = vsel %vm1115, %v1108, %v1112
        %v1117 = vand.u32 2147483647, %v792
        %vm1118 = vcmp.eq.f32.partialorder %v1117, 8.507059e+37
        %v1119 = vand.u32 %v792, 2147483648
        %v1120 = vor.u32 1.1754944e-38, %v1119
        %v1121 = vsel %vm1118, %v1120, %v1116
        %v1122 = vmul.f32 1.0, %v1121
        %v1123 = vrcp.pop %v793
        %v1124 = vmul.f32 %v793, %v1123
        %v1125 = vsub.f32 1.0, %v1124
        %v1126 = vmul.f32 %v1123, %v1125
        %v1127 = vadd.f32 %v1123, %v1126
        %vm1128 = vweird.f32 %v793
        %vm1129 = vweird.f32 %v1123
        %vm1130 = vmor %vm1128, %vm1129
        %v1131 = vsel %vm1130, %v1123, %v1127
        %v1132 = vand.u32 2147483647, %v793
        %vm1133 = vcmp.eq.f32.partialorder %v1132, 8.507059e+37
        %v1134 = vand.u32 %v793, 2147483648
        %v1135 = vor.u32 1.1754944e-38, %v1134
        %v1136 = vsel %vm1133, %v1135, %v1131
        %v1137 = vmul.f32 1.0, %v1136
        %v1138 = vrcp.pop %v794
        %v1139 = vmul.f32 %v794, %v1138
        %v1140 = vsub.f32 1.0, %v1139
        %v1141 = vmul.f32 %v1138, %v1140
        %v1142 = vadd.f32 %v1138, %v1141
        %vm1143 = vweird.f32 %v794
        %vm1144 = vweird.f32 %v1138
        %vm1145 = vmor %vm1143, %vm1144
        %v1146 = vsel %vm1145, %v1138, %v1142
        %v1147 = vand.u32 2147483647, %v794
        %vm1148 = vcmp.eq.f32.partialorder %v1147, 8.507059e+37
        %v1149 = vand.u32 %v794, 2147483648
        %v1150 = vor.u32 1.1754944e-38, %v1149
        %v1151 = vsel %vm1148, %v1150, %v1146
        %v1152 = vmul.f32 1.0, %v1151
        %v1153 = vrcp.pop %v795
        %v1154 = vmul.f32 %v795, %v1153
        %v1155 = vsub.f32 1.0, %v1154
        %v1156 = vmul.f32 %v1153, %v1155
        %v1157 = vadd.f32 %v1153, %v1156
        %vm1158 = vweird.f32 %v795
        %vm1159 = vweird.f32 %v1153
        %vm1160 = vmor %vm1158, %vm1159
        %v1161 = vsel %vm1160, %v1153, %v1157
        %v1162 = vand.u32 2147483647, %v795
        %vm1163 = vcmp.eq.f32.partialorder %v1162, 8.507059e+37
        %v1164 = vand.u32 %v795, 2147483648
        %v1165 = vor.u32 1.1754944e-38, %v1164
        %v1166 = vsel %vm1163, %v1165, %v1161
        %v1167 = vmul.f32 1.0, %v1166
        %v1168 = vrcp.pop %v796
        %v1169 = vmul.f32 %v796, %v1168
        %v1170 = vsub.f32 1.0, %v1169
        %v1171 = vmul.f32 %v1168, %v1170
        %v1172 = vadd.f32 %v1168, %v1171
        %vm1173 = vweird.f32 %v796
        %vm1174 = vweird.f32 %v1168
        %vm1175 = vmor %vm1173, %vm1174
        %v1176 = vsel %vm1175, %v1168, %v1172
        %v1177 = vand.u32 2147483647, %v796
        %vm1178 = vcmp.eq.f32.partialorder %v1177, 8.507059e+37
        %v1179 = vand.u32 %v796, 2147483648
        %v1180 = vor.u32 1.1754944e-38, %v1179
        %v1181 = vsel %vm1178, %v1180, %v1176
        %v1182 = vmul.f32 1.0, %v1181
        %v1183 = vrcp.pop %v797
        %v1184 = vmul.f32 %v797, %v1183
        %v1185 = vsub.f32 1.0, %v1184
        %v1186 = vmul.f32 %v1183, %v1185
        %v1187 = vadd.f32 %v1183, %v1186
        %vm1188 = vweird.f32 %v797
        %vm1189 = vweird.f32 %v1183
        %vm1190 = vmor %vm1188, %vm1189
        %v1191 = vsel %vm1190, %v1183, %v1187
        %v1192 = vand.u32 2147483647, %v797
        %vm1193 = vcmp.eq.f32.partialorder %v1192, 8.507059e+37
        %v1194 = vand.u32 %v797, 2147483648
        %v1195 = vor.u32 1.1754944e-38, %v1194
        %v1196 = vsel %vm1193, %v1195, %v1191
        %v1197 = vmul.f32 1.0, %v1196
        %v1198 = vrcp.pop %v798
        %v1199 = vmul.f32 %v798, %v1198
        %v1200 = vsub.f32 1.0, %v1199
        %v1201 = vmul.f32 %v1198, %v1200
        %v1202 = vadd.f32 %v1198, %v1201
        %vm1203 = vweird.f32 %v798
        %vm1204 = vweird.f32 %v1198
        %vm1205 = vmor %vm1203, %vm1204
        %v1206 = vsel %vm1205, %v1198, %v1202
        %v1207 = vand.u32 2147483647, %v798
        %vm1208 = vcmp.eq.f32.partialorder %v1207, 8.507059e+37
        %v1209 = vand.u32 %v798, 2147483648
        %v1210 = vor.u32 1.1754944e-38, %v1209
        %v1211 = vsel %vm1208, %v1210, %v1206
        %v1212 = vmul.f32 1.0, %v1211
        %v1213 = vrcp.pop %v799
        %v1214 = vmul.f32 %v799, %v1213
        %v1215 = vsub.f32 1.0, %v1214
        %v1216 = vmul.f32 %v1213, %v1215
        %v1217 = vadd.f32 %v1213, %v1216
        %vm1218 = vweird.f32 %v799
        %vm1219 = vweird.f32 %v1213
        %vm1220 = vmor %vm1218, %vm1219
        %v1221 = vsel %vm1220, %v1213, %v1217
        %v1222 = vand.u32 2147483647, %v799
        %vm1223 = vcmp.eq.f32.partialorder %v1222, 8.507059e+37
        %v1224 = vand.u32 %v799, 2147483648
        %v1225 = vor.u32 1.1754944e-38, %v1224
        %v1226 = vsel %vm1223, %v1225, %v1221
        %v1227 = vmul.f32 1.0, %v1226
        %v1228 = vrcp.pop %v800
        %v1229 = vmul.f32 %v800, %v1228
        %v1230 = vsub.f32 1.0, %v1229
        %v1231 = vmul.f32 %v1228, %v1230
        %v1232 = vadd.f32 %v1228, %v1231
        %vm1233 = vweird.f32 %v800
        %vm1234 = vweird.f32 %v1228
        %vm1235 = vmor %vm1233, %vm1234
        %v1236 = vsel %vm1235, %v1228, %v1232
        %v1237 = vand.u32 2147483647, %v800
        %vm1238 = vcmp.eq.f32.partialorder %v1237, 8.507059e+37
        %v1239 = vand.u32 %v800, 2147483648
        %v1240 = vor.u32 1.1754944e-38, %v1239
        %v1241 = vsel %vm1238, %v1240, %v1236
        %v1242 = vmul.f32 1.0, %v1241
        %v1243 = vrcp.pop %v801
        %v1244 = vmul.f32 %v801, %v1243
        %v1245 = vsub.f32 1.0, %v1244
        %v1246 = vmul.f32 %v1243, %v1245
        %v1247 = vadd.f32 %v1243, %v1246
        %vm1248 = vweird.f32 %v801
        %vm1249 = vweird.f32 %v1243
        %vm1250 = vmor %vm1248, %vm1249
        %v1251 = vsel %vm1250, %v1243, %v1247
        %v1252 = vand.u32 2147483647, %v801
        %vm1253 = vcmp.eq.f32.partialorder %v1252, 8.507059e+37
        %v1254 = vand.u32 %v801, 2147483648
        %v1255 = vor.u32 1.1754944e-38, %v1254
        %v1256 = vsel %vm1253, %v1255, %v1251
        %v1257 = vmul.f32 1.0, %v1256
        %v1258 = vrcp.pop %v802
        %v1259 = vmul.f32 %v802, %v1258
        %v1260 = vsub.f32 1.0, %v1259
        %v1261 = vmul.f32 %v1258, %v1260
        %v1262 = vadd.f32 %v1258, %v1261
        %vm1263 = vweird.f32 %v802
        %vm1264 = vweird.f32 %v1258
        %vm1265 = vmor %vm1263, %vm1264
        %v1266 = vsel %vm1265, %v1258, %v1262
        %v1267 = vand.u32 2147483647, %v802
        %vm1268 = vcmp.eq.f32.partialorder %v1267, 8.507059e+37
        %v1269 = vand.u32 %v802, 2147483648
        %v1270 = vor.u32 1.1754944e-38, %v1269
        %v1271 = vsel %vm1268, %v1270, %v1266
        %v1272 = vmul.f32 1.0, %v1271
        %v1273 = vrcp.pop %v803
        %v1274 = vmul.f32 %v803, %v1273
        %v1275 = vsub.f32 1.0, %v1274
        %v1276 = vmul.f32 %v1273, %v1275
        %v1277 = vadd.f32 %v1273, %v1276
        %vm1278 = vweird.f32 %v803
        %vm1279 = vweird.f32 %v1273
        %vm1280 = vmor %vm1278, %vm1279
        %v1281 = vsel %vm1280, %v1273, %v1277
        %v1282 = vand.u32 2147483647, %v803
        %vm1283 = vcmp.eq.f32.partialorder %v1282, 8.507059e+37
        %v1284 = vand.u32 %v803, 2147483648
        %v1285 = vor.u32 1.1754944e-38, %v1284
        %v1286 = vsel %vm1283, %v1285, %v1281
        %v1287 = vmul.f32 1.0, %v1286
        %v1288 = vrcp.pop %v804
        %v1289 = vmul.f32 %v804, %v1288
        %v1290 = vsub.f32 1.0, %v1289
        %v1291 = vmul.f32 %v1288, %v1290
        %v1292 = vadd.f32 %v1288, %v1291
        %vm1293 = vweird.f32 %v804
        %vm1294 = vweird.f32 %v1288
        %vm1295 = vmor %vm1293, %vm1294
        %v1296 = vsel %vm1295, %v1288, %v1292
        %v1297 = vand.u32 2147483647, %v804
        %vm1298 = vcmp.eq.f32.partialorder %v1297, 8.507059e+37
        %v1299 = vand.u32 %v804, 2147483648
        %v1300 = vor.u32 1.1754944e-38, %v1299
        %v1301 = vsel %vm1298, %v1300, %v1296
        %v1302 = vmul.f32 1.0, %v1301
        %v1303 = vrcp.pop %v805
        %v1304 = vmul.f32 %v805, %v1303
        %v1305 = vsub.f32 1.0, %v1304
        %v1306 = vmul.f32 %v1303, %v1305
        %v1307 = vadd.f32 %v1303, %v1306
        %vm1308 = vweird.f32 %v805
        %vm1309 = vweird.f32 %v1303
        %vm1310 = vmor %vm1308, %vm1309
        %v1311 = vsel %vm1310, %v1303, %v1307
        %v1312 = vand.u32 2147483647, %v805
        %vm1313 = vcmp.eq.f32.partialorder %v1312, 8.507059e+37
        %v1314 = vand.u32 %v805, 2147483648
        %v1315 = vor.u32 1.1754944e-38, %v1314
        %v1316 = vsel %vm1313, %v1315, %v1311
        %v1317 = vmul.f32 1.0, %v1316
        %v1318 = vrcp.pop %v806
        %v1319 = vmul.f32 %v806, %v1318
        %v1320 = vsub.f32 1.0, %v1319
        %v1321 = vmul.f32 %v1318, %v1320
        %v1322 = vadd.f32 %v1318, %v1321
        %vm1323 = vweird.f32 %v806
        %vm1324 = vweird.f32 %v1318
        %vm1325 = vmor %vm1323, %vm1324
        %v1326 = vsel %vm1325, %v1318, %v1322
        %v1327 = vand.u32 2147483647, %v806
        %vm1328 = vcmp.eq.f32.partialorder %v1327, 8.507059e+37
        %v1329 = vand.u32 %v806, 2147483648
        %v1330 = vor.u32 1.1754944e-38, %v1329
        %v1331 = vsel %vm1328, %v1330, %v1326
        %v1332 = vmul.f32 1.0, %v1331
        %v1333 = vrcp.pop %v807
        %v1334 = vmul.f32 %v807, %v1333
        %v1335 = vsub.f32 1.0, %v1334
        %v1336 = vmul.f32 %v1333, %v1335
        %v1337 = vadd.f32 %v1333, %v1336
        %vm1338 = vweird.f32 %v807
        %vm1339 = vweird.f32 %v1333
        %vm1340 = vmor %vm1338, %vm1339
        %v1341 = vsel %vm1340, %v1333, %v1337
        %v1342 = vand.u32 2147483647, %v807
        %vm1343 = vcmp.eq.f32.partialorder %v1342, 8.507059e+37
        %v1344 = vand.u32 %v807, 2147483648
        %v1345 = vor.u32 1.1754944e-38, %v1344
        %v1346 = vsel %vm1343, %v1345, %v1341
        %v1347 = vmul.f32 1.0, %v1346
        %v1348 = vrcp.pop %v808
        %v1349 = vmul.f32 %v808, %v1348
        %v1350 = vsub.f32 1.0, %v1349
        %v1351 = vmul.f32 %v1348, %v1350
        %v1352 = vadd.f32 %v1348, %v1351
        %vm1353 = vweird.f32 %v808
        %vm1354 = vweird.f32 %v1348
        %vm1355 = vmor %vm1353, %vm1354
        %v1356 = vsel %vm1355, %v1348, %v1352
        %v1357 = vand.u32 2147483647, %v808
        %vm1358 = vcmp.eq.f32.partialorder %v1357, 8.507059e+37
        %v1359 = vand.u32 %v808, 2147483648
        %v1360 = vor.u32 1.1754944e-38, %v1359
        %v1361 = vsel %vm1358, %v1360, %v1356
        %v1362 = vmul.f32 1.0, %v1361
        %v1363 = vrcp.pop %v809
        %v1364 = vmul.f32 %v809, %v1363
        %v1365 = vsub.f32 1.0, %v1364
        %v1366 = vmul.f32 %v1363, %v1365
        %v1367 = vadd.f32 %v1363, %v1366
        %vm1368 = vweird.f32 %v809
        %vm1369 = vweird.f32 %v1363
        %vm1370 = vmor %vm1368, %vm1369
        %v1371 = vsel %vm1370, %v1363, %v1367
        %v1372 = vand.u32 2147483647, %v809
        %vm1373 = vcmp.eq.f32.partialorder %v1372, 8.507059e+37
        %v1374 = vand.u32 %v809, 2147483648
        %v1375 = vor.u32 1.1754944e-38, %v1374
        %v1376 = vsel %vm1373, %v1375, %v1371
        %v1377 = vmul.f32 1.0, %v1376
        %v1378 = vrcp.pop %v810
        %v1379 = vmul.f32 %v810, %v1378
        %v1380 = vsub.f32 1.0, %v1379
        %v1381 = vmul.f32 %v1378, %v1380
        %v1382 = vadd.f32 %v1378, %v1381
        %vm1383 = vweird.f32 %v810
        %vm1384 = vweird.f32 %v1378
        %vm1385 = vmor %vm1383, %vm1384
        %v1386 = vsel %vm1385, %v1378, %v1382
        %v1387 = vand.u32 2147483647, %v810
        %vm1388 = vcmp.eq.f32.partialorder %v1387, 8.507059e+37
        %v1389 = vand.u32 %v810, 2147483648
        %v1390 = vor.u32 1.1754944e-38, %v1389
        %v1391 = vsel %vm1388, %v1390, %v1386
        %v1392 = vmul.f32 1.0, %v1391
        %v1393 = vrcp.pop %v811
        %v1394 = vmul.f32 %v811, %v1393
        %v1395 = vsub.f32 1.0, %v1394
        %v1396 = vmul.f32 %v1393, %v1395
        %v1397 = vadd.f32 %v1393, %v1396
        %vm1398 = vweird.f32 %v811
        %vm1399 = vweird.f32 %v1393
        %vm1400 = vmor %vm1398, %vm1399
        %v1401 = vsel %vm1400, %v1393, %v1397
        %v1402 = vand.u32 2147483647, %v811
        %vm1403 = vcmp.eq.f32.partialorder %v1402, 8.507059e+37
        %v1404 = vand.u32 %v811, 2147483648
        %v1405 = vor.u32 1.1754944e-38, %v1404
        %v1406 = vsel %vm1403, %v1405, %v1401
        %v1407 = vmul.f32 1.0, %v1406
        %v1408 = vrcp.pop %v812
        %v1409 = vmul.f32 %v812, %v1408
        %v1410 = vsub.f32 1.0, %v1409
        %v1411 = vmul.f32 %v1408, %v1410
        %v1412 = vadd.f32 %v1408, %v1411
        %vm1413 = vweird.f32 %v812
        %vm1414 = vweird.f32 %v1408
        %vm1415 = vmor %vm1413, %vm1414
        %v1416 = vsel %vm1415, %v1408, %v1412
        %v1417 = vand.u32 2147483647, %v812
        %vm1418 = vcmp.eq.f32.partialorder %v1417, 8.507059e+37
        %v1419 = vand.u32 %v812, 2147483648
        %v1420 = vor.u32 1.1754944e-38, %v1419
        %v1421 = vsel %vm1418, %v1420, %v1416
        %v1422 = vmul.f32 1.0, %v1421
        %v1423 = vrcp.pop %v813
        %v1424 = vmul.f32 %v813, %v1423
        %v1425 = vsub.f32 1.0, %v1424
        %v1426 = vmul.f32 %v1423, %v1425
        %v1427 = vadd.f32 %v1423, %v1426
        %vm1428 = vweird.f32 %v813
        %vm1429 = vweird.f32 %v1423
        %vm1430 = vmor %vm1428, %vm1429
        %v1431 = vsel %vm1430, %v1423, %v1427
        %v1432 = vand.u32 2147483647, %v813
        %vm1433 = vcmp.eq.f32.partialorder %v1432, 8.507059e+37
        %v1434 = vand.u32 %v813, 2147483648
        %v1435 = vor.u32 1.1754944e-38, %v1434
        %v1436 = vsel %vm1433, %v1435, %v1431
        %v1437 = vmul.f32 1.0, %v1436
        %v1438 = vrcp.pop %v814
        %v1439 = vmul.f32 %v814, %v1438
        %v1440 = vsub.f32 1.0, %v1439
        %v1441 = vmul.f32 %v1438, %v1440
        %v1442 = vadd.f32 %v1438, %v1441
        %vm1443 = vweird.f32 %v814
        %vm1444 = vweird.f32 %v1438
        %vm1445 = vmor %vm1443, %vm1444
        %v1446 = vsel %vm1445, %v1438, %v1442
        %v1447 = vand.u32 2147483647, %v814
        %vm1448 = vcmp.eq.f32.partialorder %v1447, 8.507059e+37
        %v1449 = vand.u32 %v814, 2147483648
        %v1450 = vor.u32 1.1754944e-38, %v1449
        %v1451 = vsel %vm1448, %v1450, %v1446
        %v1452 = vmul.f32 1.0, %v1451
        %v1453 = vrcp.pop %v815
        %v1454 = vmul.f32 %v815, %v1453
        %v1455 = vsub.f32 1.0, %v1454
        %v1456 = vmul.f32 %v1453, %v1455
        %v1457 = vadd.f32 %v1453, %v1456
        %vm1458 = vweird.f32 %v815
        %vm1459 = vweird.f32 %v1453
        %vm1460 = vmor %vm1458, %vm1459
        %v1461 = vsel %vm1460, %v1453, %v1457
        %v1462 = vand.u32 2147483647, %v815
        %vm1463 = vcmp.eq.f32.partialorder %v1462, 8.507059e+37
        %v1464 = vand.u32 %v815, 2147483648
        %v1465 = vor.u32 1.1754944e-38, %v1464
        %v1466 = vsel %vm1463, %v1465, %v1461
        %v1467 = vmul.f32 1.0, %v1466
        %v1468 = vrcp.pop %v816
        %v1469 = vmul.f32 %v816, %v1468
        %v1470 = vsub.f32 1.0, %v1469
        %v1471 = vmul.f32 %v1468, %v1470
        %v1472 = vadd.f32 %v1468, %v1471
        %vm1473 = vweird.f32 %v816
        %vm1474 = vweird.f32 %v1468
        %vm1475 = vmor %vm1473, %vm1474
        %v1476 = vsel %vm1475, %v1468, %v1472
        %v1477 = vand.u32 2147483647, %v816
        %vm1478 = vcmp.eq.f32.partialorder %v1477, 8.507059e+37
        %v1479 = vand.u32 %v816, 2147483648
        %v1480 = vor.u32 1.1754944e-38, %v1479
        %v1481 = vsel %vm1478, %v1480, %v1476
        %v1482 = vmul.f32 1.0, %v1481
        %v1483 = vrcp.pop %v817
        %v1484 = vmul.f32 %v817, %v1483
        %v1485 = vsub.f32 1.0, %v1484
        %v1486 = vmul.f32 %v1483, %v1485
        %v1487 = vadd.f32 %v1483, %v1486
        %vm1488 = vweird.f32 %v817
        %vm1489 = vweird.f32 %v1483
        %vm1490 = vmor %vm1488, %vm1489
        %v1491 = vsel %vm1490, %v1483, %v1487
        %v1492 = vand.u32 2147483647, %v817
        %vm1493 = vcmp.eq.f32.partialorder %v1492, 8.507059e+37
        %v1494 = vand.u32 %v817, 2147483648
        %v1495 = vor.u32 1.1754944e-38, %v1494
        %v1496 = vsel %vm1493, %v1495, %v1491
        %v1497 = vmul.f32 1.0, %v1496
        %v1498 = vrcp.pop %v818
        %v1499 = vmul.f32 %v818, %v1498
        %v1500 = vsub.f32 1.0, %v1499
        %v1501 = vmul.f32 %v1498, %v1500
        %v1502 = vadd.f32 %v1498, %v1501
        %vm1503 = vweird.f32 %v818
        %vm1504 = vweird.f32 %v1498
        %vm1505 = vmor %vm1503, %vm1504
        %v1506 = vsel %vm1505, %v1498, %v1502
        %v1507 = vand.u32 2147483647, %v818
        %vm1508 = vcmp.eq.f32.partialorder %v1507, 8.507059e+37
        %v1509 = vand.u32 %v818, 2147483648
        %v1510 = vor.u32 1.1754944e-38, %v1509
        %v1511 = vsel %vm1508, %v1510, %v1506
        %v1512 = vmul.f32 1.0, %v1511
        %v1513 = vrcp.pop %v819
        %v1514 = vmul.f32 %v819, %v1513
        %v1515 = vsub.f32 1.0, %v1514
        %v1516 = vmul.f32 %v1513, %v1515
        %v1517 = vadd.f32 %v1513, %v1516
        %vm1518 = vweird.f32 %v819
        %vm1519 = vweird.f32 %v1513
        %vm1520 = vmor %vm1518, %vm1519
        %v1521 = vsel %vm1520, %v1513, %v1517
        %v1522 = vand.u32 2147483647, %v819
        %vm1523 = vcmp.eq.f32.partialorder %v1522, 8.507059e+37
        %v1524 = vand.u32 %v819, 2147483648
        %v1525 = vor.u32 1.1754944e-38, %v1524
        %v1526 = vsel %vm1523, %v1525, %v1521
        %v1527 = vmul.f32 1.0, %v1526
        %v1528 = vrcp.pop %v820
        %v1529 = vmul.f32 %v820, %v1528
        %v1530 = vsub.f32 1.0, %v1529
        %v1531 = vmul.f32 %v1528, %v1530
        %v1532 = vadd.f32 %v1528, %v1531
        %vm1533 = vweird.f32 %v820
        %vm1534 = vweird.f32 %v1528
        %vm1535 = vmor %vm1533, %vm1534
        %v1536 = vsel %vm1535, %v1528, %v1532
        %v1537 = vand.u32 2147483647, %v820
        %vm1538 = vcmp.eq.f32.partialorder %v1537, 8.507059e+37
        %v1539 = vand.u32 %v820, 2147483648
        %v1540 = vor.u32 1.1754944e-38, %v1539
        %v1541 = vsel %vm1538, %v1540, %v1536
        %v1542 = vmul.f32 1.0, %v1541
        %v1543 = vrcp.pop %v821
        %v1544 = vmul.f32 %v821, %v1543
        %v1545 = vsub.f32 1.0, %v1544
        %v1546 = vmul.f32 %v1543, %v1545
        %v1547 = vadd.f32 %v1543, %v1546
        %vm1548 = vweird.f32 %v821
        %vm1549 = vweird.f32 %v1543
        %vm1550 = vmor %vm1548, %vm1549
        %v1551 = vsel %vm1550, %v1543, %v1547
        %v1552 = vand.u32 2147483647, %v821
        %vm1553 = vcmp.eq.f32.partialorder %v1552, 8.507059e+37
        %v1554 = vand.u32 %v821, 2147483648
        %v1555 = vor.u32 1.1754944e-38, %v1554
        %v1556 = vsel %vm1553, %v1555, %v1551
        %v1557 = vmul.f32 1.0, %v1556
        %v1558 = vrcp.pop %v822
        %v1559 = vmul.f32 %v822, %v1558
        %v1560 = vsub.f32 1.0, %v1559
        %v1561 = vmul.f32 %v1558, %v1560
        %v1562 = vadd.f32 %v1558, %v1561
        %vm1563 = vweird.f32 %v822
        %vm1564 = vweird.f32 %v1558
        %vm1565 = vmor %vm1563, %vm1564
        %v1566 = vsel %vm1565, %v1558, %v1562
        %v1567 = vand.u32 2147483647, %v822
        %vm1568 = vcmp.eq.f32.partialorder %v1567, 8.507059e+37
        %v1569 = vand.u32 %v822, 2147483648
        %v1570 = vor.u32 1.1754944e-38, %v1569
        %v1571 = vsel %vm1568, %v1570, %v1566
        %v1572 = vmul.f32 1.0, %v1571
        %v1573 = vrcp.pop %v823
        %v1574 = vmul.f32 %v823, %v1573
        %v1575 = vsub.f32 1.0, %v1574
        %v1576 = vmul.f32 %v1573, %v1575
        %v1577 = vadd.f32 %v1573, %v1576
        %vm1578 = vweird.f32 %v823
        %vm1579 = vweird.f32 %v1573
        %vm1580 = vmor %vm1578, %vm1579
        %v1581 = vsel %vm1580, %v1573, %v1577
        %v1582 = vand.u32 2147483647, %v823
        %vm1583 = vcmp.eq.f32.partialorder %v1582, 8.507059e+37
        %v1584 = vand.u32 %v823, 2147483648
        %v1585 = vor.u32 1.1754944e-38, %v1584
        %v1586 = vsel %vm1583, %v1585, %v1581
        %v1587 = vmul.f32 1.0, %v1586
        %v1588 = vrcp.pop %v824
        %v1589 = vmul.f32 %v824, %v1588
        %v1590 = vsub.f32 1.0, %v1589
        %v1591 = vmul.f32 %v1588, %v1590
        %v1592 = vadd.f32 %v1588, %v1591
        %vm1593 = vweird.f32 %v824
        %vm1594 = vweird.f32 %v1588
        %vm1595 = vmor %vm1593, %vm1594
        %v1596 = vsel %vm1595, %v1588, %v1592
        %v1597 = vand.u32 2147483647, %v824
        %vm1598 = vcmp.eq.f32.partialorder %v1597, 8.507059e+37
        %v1599 = vand.u32 %v824, 2147483648
        %v1600 = vor.u32 1.1754944e-38, %v1599
        %v1601 = vsel %vm1598, %v1600, %v1596
        %v1602 = vmul.f32 1.0, %v1601
        %v1603 = vrcp.pop %v825
        %v1604 = vmul.f32 %v825, %v1603
        %v1605 = vsub.f32 1.0, %v1604
        %v1606 = vmul.f32 %v1603, %v1605
        %v1607 = vadd.f32 %v1603, %v1606
        %vm1608 = vweird.f32 %v825
        %vm1609 = vweird.f32 %v1603
        %vm1610 = vmor %vm1608, %vm1609
        %v1611 = vsel %vm1610, %v1603, %v1607
        %v1612 = vand.u32 2147483647, %v825
        %vm1613 = vcmp.eq.f32.partialorder %v1612, 8.507059e+37
        %v1614 = vand.u32 %v825, 2147483648
        %v1615 = vor.u32 1.1754944e-38, %v1614
        %v1616 = vsel %vm1613, %v1615, %v1611
        %v1617 = vmul.f32 1.0, %v1616
        %v1618 = vrcp.pop %v826
        %v1619 = vmul.f32 %v826, %v1618
        %v1620 = vsub.f32 1.0, %v1619
        %v1621 = vmul.f32 %v1618, %v1620
        %v1622 = vadd.f32 %v1618, %v1621
        %vm1623 = vweird.f32 %v826
        %vm1624 = vweird.f32 %v1618
        %vm1625 = vmor %vm1623, %vm1624
        %v1626 = vsel %vm1625, %v1618, %v1622
        %v1627 = vand.u32 2147483647, %v826
        %vm1628 = vcmp.eq.f32.partialorder %v1627, 8.507059e+37
        %v1629 = vand.u32 %v826, 2147483648
        %v1630 = vor.u32 1.1754944e-38, %v1629
        %v1631 = vsel %vm1628, %v1630, %v1626
        %v1632 = vmul.f32 1.0, %v1631
        %v1633 = vrcp.pop %v827
        %v1634 = vmul.f32 %v827, %v1633
        %v1635 = vsub.f32 1.0, %v1634
        %v1636 = vmul.f32 %v1633, %v1635
        %v1637 = vadd.f32 %v1633, %v1636
        %vm1638 = vweird.f32 %v827
        %vm1639 = vweird.f32 %v1633
        %vm1640 = vmor %vm1638, %vm1639
        %v1641 = vsel %vm1640, %v1633, %v1637
        %v1642 = vand.u32 2147483647, %v827
        %vm1643 = vcmp.eq.f32.partialorder %v1642, 8.507059e+37
        %v1644 = vand.u32 %v827, 2147483648
        %v1645 = vor.u32 1.1754944e-38, %v1644
        %v1646 = vsel %vm1643, %v1645, %v1641
        %v1647 = vmul.f32 1.0, %v1646
        %v1648 = vrcp.pop %v828
        %v1649 = vmul.f32 %v828, %v1648
        %v1650 = vsub.f32 1.0, %v1649
        %v1651 = vmul.f32 %v1648, %v1650
        %v1652 = vadd.f32 %v1648, %v1651
        %vm1653 = vweird.f32 %v828
        %vm1654 = vweird.f32 %v1648
        %vm1655 = vmor %vm1653, %vm1654
        %v1656 = vsel %vm1655, %v1648, %v1652
        %v1657 = vand.u32 2147483647, %v828
        %vm1658 = vcmp.eq.f32.partialorder %v1657, 8.507059e+37
        %v1659 = vand.u32 %v828, 2147483648
        %v1660 = vor.u32 1.1754944e-38, %v1659
        %v1661 = vsel %vm1658, %v1660, %v1656
        %v1662 = vmul.f32 1.0, %v1661
        %v1663 = vrcp.pop %v829
        %v1664 = vmul.f32 %v829, %v1663
        %v1665 = vsub.f32 1.0, %v1664
        %v1666 = vmul.f32 %v1663, %v1665
        %v1667 = vadd.f32 %v1663, %v1666
        %vm1668 = vweird.f32 %v829
        %vm1669 = vweird.f32 %v1663
        %vm1670 = vmor %vm1668, %vm1669
        %v1671 = vsel %vm1670, %v1663, %v1667
        %v1672 = vand.u32 2147483647, %v829
        %vm1673 = vcmp.eq.f32.partialorder %v1672, 8.507059e+37
        %v1674 = vand.u32 %v829, 2147483648
        %v1675 = vor.u32 1.1754944e-38, %v1674
        %v1676 = vsel %vm1673, %v1675, %v1671
        %v1677 = vmul.f32 1.0, %v1676
        %v1678 = vrcp.pop %v830
        %v1679 = vmul.f32 %v830, %v1678
        %v1680 = vsub.f32 1.0, %v1679
        %v1681 = vmul.f32 %v1678, %v1680
        %v1682 = vadd.f32 %v1678, %v1681
        %vm1683 = vweird.f32 %v830
        %vm1684 = vweird.f32 %v1678
        %vm1685 = vmor %vm1683, %vm1684
        %v1686 = vsel %vm1685, %v1678, %v1682
        %v1687 = vand.u32 2147483647, %v830
        %vm1688 = vcmp.eq.f32.partialorder %v1687, 8.507059e+37
        %v1689 = vand.u32 %v830, 2147483648
        %v1690 = vor.u32 1.1754944e-38, %v1689
        %v1691 = vsel %vm1688, %v1690, %v1686
        %v1692 = vmul.f32 1.0, %v1691
        %v1693 = vrcp.pop %v831
        %v1694 = vmul.f32 %v831, %v1693
        %v1695 = vsub.f32 1.0, %v1694
        %v1696 = vmul.f32 %v1693, %v1695
        %v1697 = vadd.f32 %v1693, %v1696
        %vm1698 = vweird.f32 %v831
        %vm1699 = vweird.f32 %v1693
        %vm1700 = vmor %vm1698, %vm1699
        %v1701 = vsel %vm1700, %v1693, %v1697
        %v1702 = vand.u32 2147483647, %v831
        %vm1703 = vcmp.eq.f32.partialorder %v1702, 8.507059e+37
        %v1704 = vand.u32 %v831, 2147483648
        %v1705 = vor.u32 1.1754944e-38, %v1704
        %v1706 = vsel %vm1703, %v1705, %v1701
        %v1707 = vmul.f32 1.0, %v1706
        %v1708 = vrcp.pop %v832
        %v1709 = vmul.f32 %v832, %v1708
        %v1710 = vsub.f32 1.0, %v1709
        %v1711 = vmul.f32 %v1708, %v1710
        %v1712 = vadd.f32 %v1708, %v1711
        %vm1713 = vweird.f32 %v832
        %vm1714 = vweird.f32 %v1708
        %vm1715 = vmor %vm1713, %vm1714
        %v1716 = vsel %vm1715, %v1708, %v1712
        %v1717 = vand.u32 2147483647, %v832
        %vm1718 = vcmp.eq.f32.partialorder %v1717, 8.507059e+37
        %v1719 = vand.u32 %v832, 2147483648
        %v1720 = vor.u32 1.1754944e-38, %v1719
        %v1721 = vsel %vm1718, %v1720, %v1716
        %v1722 = vmul.f32 1.0, %v1721
        %v1723 = vrcp.pop %v833
        %v1724 = vmul.f32 %v833, %v1723
        %v1725 = vsub.f32 1.0, %v1724
        %v1726 = vmul.f32 %v1723, %v1725
        %v1727 = vadd.f32 %v1723, %v1726
        %vm1728 = vweird.f32 %v833
        %vm1729 = vweird.f32 %v1723
        %vm1730 = vmor %vm1728, %vm1729
        %v1731 = vsel %vm1730, %v1723, %v1727
        %v1732 = vand.u32 2147483647, %v833
        %vm1733 = vcmp.eq.f32.partialorder %v1732, 8.507059e+37
        %v1734 = vand.u32 %v833, 2147483648
        %v1735 = vor.u32 1.1754944e-38, %v1734
        %v1736 = vsel %vm1733, %v1735, %v1731
        %v1737 = vmul.f32 1.0, %v1736
        %v1738 = vrcp.pop %v834
        %v1739 = vmul.f32 %v834, %v1738
        %v1740 = vsub.f32 1.0, %v1739
        %v1741 = vmul.f32 %v1738, %v1740
        %v1742 = vadd.f32 %v1738, %v1741
        %vm1743 = vweird.f32 %v834
        %vm1744 = vweird.f32 %v1738
        %vm1745 = vmor %vm1743, %vm1744
        %v1746 = vsel %vm1745, %v1738, %v1742
        %v1747 = vand.u32 2147483647, %v834
        %vm1748 = vcmp.eq.f32.partialorder %v1747, 8.507059e+37
        %v1749 = vand.u32 %v834, 2147483648
        %v1750 = vor.u32 1.1754944e-38, %v1749
        %v1751 = vsel %vm1748, %v1750, %v1746
        %v1752 = vmul.f32 1.0, %v1751
        %v1753 = vrcp.pop %v835
        %v1754 = vmul.f32 %v835, %v1753
        %v1755 = vsub.f32 1.0, %v1754
        %v1756 = vmul.f32 %v1753, %v1755
        %v1757 = vadd.f32 %v1753, %v1756
        %vm1758 = vweird.f32 %v835
        %vm1759 = vweird.f32 %v1753
        %vm1760 = vmor %vm1758, %vm1759
        %v1761 = vsel %vm1760, %v1753, %v1757
        %v1762 = vand.u32 2147483647, %v835
        %vm1763 = vcmp.eq.f32.partialorder %v1762, 8.507059e+37
        %v1764 = vand.u32 %v835, 2147483648
        %v1765 = vor.u32 1.1754944e-38, %v1764
        %v1766 = vsel %vm1763, %v1765, %v1761
        %v1767 = vmul.f32 1.0, %v1766
        %v1768 = vrcp.pop %v836
        %v1769 = vmul.f32 %v836, %v1768
        %v1770 = vsub.f32 1.0, %v1769
        %v1771 = vmul.f32 %v1768, %v1770
        %v1772 = vadd.f32 %v1768, %v1771
        %vm1773 = vweird.f32 %v836
        %vm1774 = vweird.f32 %v1768
        %vm1775 = vmor %vm1773, %vm1774
        %v1776 = vsel %vm1775, %v1768, %v1772
        %v1777 = vand.u32 2147483647, %v836
        %vm1778 = vcmp.eq.f32.partialorder %v1777, 8.507059e+37
        %v1779 = vand.u32 %v836, 2147483648
        %v1780 = vor.u32 1.1754944e-38, %v1779
        %v1781 = vsel %vm1778, %v1780, %v1776
        %v1782 = vmul.f32 1.0, %v1781
        %v1783 = vrcp.pop %v837
        %v1784 = vmul.f32 %v837, %v1783
        %v1785 = vsub.f32 1.0, %v1784
        %v1786 = vmul.f32 %v1783, %v1785
        %v1787 = vadd.f32 %v1783, %v1786
        %vm1788 = vweird.f32 %v837
        %vm1789 = vweird.f32 %v1783
        %vm1790 = vmor %vm1788, %vm1789
        %v1791 = vsel %vm1790, %v1783, %v1787
        %v1792 = vand.u32 2147483647, %v837
        %vm1793 = vcmp.eq.f32.partialorder %v1792, 8.507059e+37
        %v1794 = vand.u32 %v837, 2147483648
        %v1795 = vor.u32 1.1754944e-38, %v1794
        %v1796 = vsel %vm1793, %v1795, %v1791
        %v1797 = vmul.f32 1.0, %v1796
        %v1798 = vmul.f32 %v374, %v852
        %v1799 = vmul.f32 %v487, %v867
        %v1800 = vmul.f32 %v377, %v882
        %v1801 = vmul.f32 %v490, %v897
        %v1802 = vmul.f32 %v380, %v912
        %v1803 = vmul.f32 %v493, %v927
        %v1804 = vmul.f32 %v383, %v942
        %v1805 = vmul.f32 %v496, %v957
        %v1806 = vmul.f32 %v386, %v972
        %v1807 = vmul.f32 %v499, %v987
        %v1808 = vmul.f32 %v389, %v1002
        %v1809 = vmul.f32 %v502, %v1017
        %v1810 = vmul.f32 %v392, %v1032
        %v1811 = vmul.f32 %v505, %v1047
        %v1812 = vmul.f32 %v395, %v1062
        %v1813 = vmul.f32 %v508, %v1077
        %v1814 = vmul.f32 %v398, %v1092
        %v1815 = vmul.f32 %v511, %v1107
        %v1816 = vmul.f32 %v401, %v1122
        %v1817 = vmul.f32 %v514, %v1137
        %v1818 = vmul.f32 %v404, %v1152
        %v1819 = vmul.f32 %v517, %v1167
        %v1820 = vmul.f32 %v407, %v1182
        %v1821 = vmul.f32 %v520, %v1197
        %v1822 = vmul.f32 %v410, %v1212
        %v1823 = vmul.f32 %v523, %v1227
        %v1824 = vmul.f32 %v413, %v1242
        %v1825 = vmul.f32 %v526, %v1257
        %v1826 = vmul.f32 %v416, %v1272
        %v1827 = vmul.f32 %v529, %v1287
        %v1828 = vmul.f32 %v419, %v1302
        %v1829 = vmul.f32 %v532, %v1317
        %v1830 = vmul.f32 %v422, %v1332
        %v1831 = vmul.f32 %v535, %v1347
        %v1832 = vmul.f32 %v425, %v1362
        %v1833 = vmul.f32 %v538, %v1377
        %v1834 = vmul.f32 %v428, %v1392
        %v1835 = vmul.f32 %v541, %v1407
        %v1836 = vmul.f32 %v431, %v1422
        %v1837 = vmul.f32 %v544, %v1437
        %v1838 = vmul.f32 %v434, %v1452
        %v1839 = vmul.f32 %v547, %v1467
        %v1840 = vmul.f32 %v437, %v1482
        %v1841 = vmul.f32 %v550, %v1497
        %v1842 = vmul.f32 %v440, %v1512
        %v1843 = vmul.f32 %v553, %v1527
        %v1844 = vmul.f32 %v443, %v1542
        %v1845 = vmul.f32 %v556, %v1557
        %v1846 = vmul.f32 %v446, %v1572
        %v1847 = vmul.f32 %v559, %v1587
        %v1848 = vmul.f32 %v449, %v1602
        %v1849 = vmul.f32 %v562, %v1617
        %v1850 = vmul.f32 %v452, %v1632
        %v1851 = vmul.f32 %v565, %v1647
        %v1852 = vmul.f32 %v455, %v1662
        %v1853 = vmul.f32 %v568, %v1677
        %v1854 = vmul.f32 %v458, %v1692
        %v1855 = vmul.f32 %v571, %v1707
        %v1856 = vmul.f32 %v461, %v1722
        %v1857 = vmul.f32 %v574, %v1737
        %v1858 = vmul.f32 %v464, %v1752
        %v1859 = vmul.f32 %v577, %v1767
        %v1860 = vmul.f32 %v467, %v1782
        %v1861 = vmul.f32 %v580, %v1797
        %1862 = vst [vmem:[%s195] sm:$0xff] %v1798
        %1863 = vst [vmem:[%s195 + $0x8] sm:$0xff] %v1800
        %1864 = vst [vmem:[%s195 + $0x10] sm:$0xff] %v1802
        %1865 = vst [vmem:[%s195 + $0x18] sm:$0xff] %v1804
        %1866 = vst [vmem:[%s195 + $0x20] sm:$0xff] %v1806
        %1867 = vst [vmem:[%s195 + $0x28] sm:$0xff] %v1808
        %1868 = vst [vmem:[%s195 + $0x30] sm:$0xff] %v1810
        %1869 = vst [vmem:[%s195 + $0x38] sm:$0xff] %v1812
        %1870 = vst [vmem:[%s195 + $0x40] sm:$0xff] %v1814
        %1871 = vst [vmem:[%s195 + $0x48] sm:$0xff] %v1816
        %1872 = vst [vmem:[%s195 + $0x50] sm:$0xff] %v1818
        %1873 = vst [vmem:[%s195 + $0x58] sm:$0xff] %v1820
        %1874 = vst [vmem:[%s195 + $0x60] sm:$0xff] %v1822
        %1875 = vst [vmem:[%s195 + $0x68] sm:$0xff] %v1824
        %1876 = vst [vmem:[%s195 + $0x70] sm:$0xff] %v1826
        %1877 = vst [vmem:[%s195 + $0x78] sm:$0xff] %v1828
        %1878 = vst [vmem:[%s195 + $0x80] sm:$0xff] %v1830
        %1879 = vst [vmem:[%s195 + $0x88] sm:$0xff] %v1832
        %1880 = vst [vmem:[%s195 + $0x90] sm:$0xff] %v1834
        %1881 = vst [vmem:[%s195 + $0x98] sm:$0xff] %v1836
        %1882 = vst [vmem:[%s195 + $0xa0] sm:$0xff] %v1838
        %1883 = vst [vmem:[%s195 + $0xa8] sm:$0xff] %v1840
        %1884 = vst [vmem:[%s195 + $0xb0] sm:$0xff] %v1842
        %1885 = vst [vmem:[%s195 + $0xb8] sm:$0xff] %v1844
        %1886 = vst [vmem:[%s195 + $0xc0] sm:$0xff] %v1846
        %1887 = vst [vmem:[%s195 + $0xc8] sm:$0xff] %v1848
        %1888 = vst [vmem:[%s195 + $0xd0] sm:$0xff] %v1850
        %1889 = vst [vmem:[%s195 + $0xd8] sm:$0xff] %v1852
        %1890 = vst [vmem:[%s195 + $0xe0] sm:$0xff] %v1854
        %1891 = vst [vmem:[%s195 + $0xe8] sm:$0xff] %v1856
        %1892 = vst [vmem:[%s195 + $0xf0] sm:$0xff] %v1858
        %1893 = vst [vmem:[%s195 + $0xf8] sm:$0xff] %v1860
        %1894 = vst [vmem:[%s202] sm:$0xff] %v1799
        %1895 = vst [vmem:[%s202 + $0x8] sm:$0xff] %v1801
        %1896 = vst [vmem:[%s202 + $0x10] sm:$0xff] %v1803
        %1897 = vst [vmem:[%s202 + $0x18] sm:$0xff] %v1805
        %1898 = vst [vmem:[%s202 + $0x20] sm:$0xff] %v1807
        %1899 = vst [vmem:[%s202 + $0x28] sm:$0xff] %v1809
        %1900 = vst [vmem:[%s202 + $0x30] sm:$0xff] %v1811
        %1901 = vst [vmem:[%s202 + $0x38] sm:$0xff] %v1813
        %1902 = vst [vmem:[%s202 + $0x40] sm:$0xff] %v1815
        %1903 = vst [vmem:[%s202 + $0x48] sm:$0xff] %v1817
        %1904 = vst [vmem:[%s202 + $0x50] sm:$0xff] %v1819
        %1905 = vst [vmem:[%s202 + $0x58] sm:$0xff] %v1821
        %1906 = vst [vmem:[%s202 + $0x60] sm:$0xff] %v1823
        %1907 = vst [vmem:[%s202 + $0x68] sm:$0xff] %v1825
        %1908 = vst [vmem:[%s202 + $0x70] sm:$0xff] %v1827
        %1909 = vst [vmem:[%s202 + $0x78] sm:$0xff] %v1829
        %1910 = vst [vmem:[%s202 + $0x80] sm:$0xff] %v1831
        %1911 = vst [vmem:[%s202 + $0x88] sm:$0xff] %v1833
        %1912 = vst [vmem:[%s202 + $0x90] sm:$0xff] %v1835
        %1913 = vst [vmem:[%s202 + $0x98] sm:$0xff] %v1837
        %1914 = vst [vmem:[%s202 + $0xa0] sm:$0xff] %v1839
        %1915 = vst [vmem:[%s202 + $0xa8] sm:$0xff] %v1841
        %1916 = vst [vmem:[%s202 + $0xb0] sm:$0xff] %v1843
        %1917 = vst [vmem:[%s202 + $0xb8] sm:$0xff] %v1845
        %1918 = vst [vmem:[%s202 + $0xc0] sm:$0xff] %v1847
        %1919 = vst [vmem:[%s202 + $0xc8] sm:$0xff] %v1849
        %1920 = vst [vmem:[%s202 + $0xd0] sm:$0xff] %v1851
        %1921 = vst [vmem:[%s202 + $0xd8] sm:$0xff] %v1853
        %1922 = vst [vmem:[%s202 + $0xe0] sm:$0xff] %v1855
        %1923 = vst [vmem:[%s202 + $0xe8] sm:$0xff] %v1857
        %1924 = vst [vmem:[%s202 + $0xf0] sm:$0xff] %v1859
        %1925 = vst [vmem:[%s202 + $0xf8] sm:$0xff] %v1861
        %s1926 = sand.u32 %s98, 1
        %s1927 = scalar_lea.sflag [#allocation3], %s1926
        %s1928 = sand.u32 %s98, 1
        %s1929 = smul.addr %s1928, 256
        %s1930 = scalar_lea.vmem [#allocation2], %s1929
        %s1931 = sand.u32 %s124, 1
        %s1932 = scalar_lea.sflag [#allocation5], %s1931
        %s1933 = sand.u32 %s124, 1
        %s1934 = smul.addr %s1933, 256
        %s1935 = scalar_lea.vmem [#allocation4], %s1934
        // Predicated region
        $region33: #{tpu_custom_call.1} parent=31 // pred_check
          %p1936 = pneg %p108
        $region34: #{tpu_custom_call.1} parent=31 // pred_check_branch
          %1938 = sbr.rel (%p1936) target = $region36
        $region35: #{tpu_custom_call.1} parent=31 // pred_region
          %s1939 = smul.u32 32, %s22
          %1941 = vsyncadd %s1927, 0
          %s1942 = smul.addr %s1939, 8
          %s1943 = scalar_lea.hbm %s3, %s1942
          %s1944 = sshll.u32 %s1930, 4
          %s1945 = int_to_ptr.vmem [resolvable:$true] %s1944
          %s1946 = sshll.u32 %s1943, 4
          %s1947 = int_to_ptr.hbm [resolvable:$true] %s1946
          %1952 = dma.vmem_to_hbm [thread:$0]  %s1945, 4096, %s1947, %s1927, 128, 128, 8
        $region36: #{tpu_custom_call.1} parent=31 // pred_fallthru
          _
        // Predicated region
        $region37: #{tpu_custom_call.1} parent=31 // pred_check
          %p1953 = pneg %p134
        $region38: #{tpu_custom_call.1} parent=31 // pred_check_branch
          %1955 = sbr.rel (%p1953) target = $region40
        $region39: #{tpu_custom_call.1} parent=31 // pred_region
          %s1956 = smul.u32 32, %s22
          %1958 = vsyncadd %s1932, 0
          %s1959 = smul.addr %s1956, 8
          %s1960 = scalar_lea.hbm %s4, %s1959
          %s1961 = sshll.u32 %s1935, 4
          %s1962 = int_to_ptr.vmem [resolvable:$true] %s1961
          %s1963 = sshll.u32 %s1960, 4
          %s1964 = int_to_ptr.hbm [resolvable:$true] %s1963
          %1969 = dma.vmem_to_hbm [thread:$0]  %s1962, 4096, %s1964, %s1932, 128, 128, 8
        $region40: #{tpu_custom_call.1} parent=31 // pred_fallthru
          _
      $region32: #{tpu_custom_call.1} parent=5 // pred_fallthru
        _
      %p1970 = scmp.le.s32.totalorder 2, %s17
      // Predicated region
      $region41: #{tpu_custom_call.1} parent=5 // pred_check
        %p1971 = pneg %p1970
      $region42: #{tpu_custom_call.1} parent=5 // pred_check_branch
        %1973 = sbr.rel (%p1971) target = $region44
      $region43: #{tpu_custom_call.1} parent=5 // pred_region
        %s1974 = ssub.s32 %s17, 2
        // Predicated region
        $region45: #{tpu_custom_call.1} parent=43 // pred_check
          %p1975 = pneg %p114
        $region46: #{tpu_custom_call.1} parent=43 // pred_check_branch
          %1977 = sbr.rel (%p1975) target = $region48
        $region47: #{tpu_custom_call.1} parent=43 // pred_region
          %s1978 = sand.u32 %s99, 1
          %s1979 = scalar_lea.sflag [#allocation3], %s1978
          %s1980 = sand.u32 %s99, 1
          %s1981 = smul.addr %s1980, 256
          %s1982 = scalar_lea.vmem [#allocation2], %s1981
          %1984 = dma.done %s1979, 4096
        $region48: #{tpu_custom_call.1} parent=43 // pred_fallthru
          _
        // Predicated region
        $region49: #{tpu_custom_call.1} parent=43 // pred_check
          %p1985 = pneg %p140
        $region50: #{tpu_custom_call.1} parent=43 // pred_check_branch
          %1987 = sbr.rel (%p1985) target = $region52
        $region51: #{tpu_custom_call.1} parent=43 // pred_region
          %s1988 = sand.u32 %s125, 1
          %s1989 = scalar_lea.sflag [#allocation5], %s1988
          %s1990 = sand.u32 %s125, 1
          %s1991 = smul.addr %s1990, 256
          %s1992 = scalar_lea.vmem [#allocation4], %s1991
          %1994 = dma.done %s1989, 4096
        $region52: #{tpu_custom_call.1} parent=43 // pred_fallthru
          _
      $region44: #{tpu_custom_call.1} parent=5 // pred_fallthru
        _
    $region6: #{tpu_custom_call.1} parent=1 // loop_footer
      %s21 = sadd.s32 1, %s17
    $region7: #{tpu_custom_call.1} parent=1 // loop_footer_branch
      %16 = sbr.rel target = $region3
    $region8: #{tpu_custom_call.1} parent=1 // loop_exit
      _
    %1995 = vsyncpa [#allocation3], 1
    %s1996 = scalar_lea.sflag [#allocation3], 1
    %1997 = vsyncpa %s1996, 1
    %1998 = vsyncpa [#allocation5], 1
    %s1999 = scalar_lea.sflag [#allocation5], 1
    %2000 = vsyncpa %s1999, 1

</llo_original>
